<compile_context>
chip_gen: v7x
topology: tpu7x:2x2x1
jax: 0.10.0
libtpu: 0.0.40
codegen_flags: <defaults>
</compile_context>

<pallas_src>
import functools

import jax
import jax.numpy as jnp
from jax import lax
from jax.experimental import pallas as pl
from jax.experimental.pallas import tpu as pltpu

_MXU_DTYPE = jnp.bfloat16      # MXU inputs; accumulation stays f32
_LANE = 128

_CFG = None


def _hw_config():
    """Per-generation tile / VMEM budget (v7x: 64 MiB VMEM per TC, 2 TCs)."""
    vmem_cap = 128 * 1024 * 1024
    try:
        info = pltpu.get_tpu_info()
        vmem_cap = int(getattr(info, "vmem_capacity_bytes", vmem_cap))
    except Exception:
        pass
    if vmem_cap <= 64 * 1024 * 1024:
        # v7x-class: stay well under 64 MiB, make sure both TCs get blocks.
        return dict(vmem_limit=48 * 1024 * 1024, tm=256, tk=512, tn=128,
                    te=128, min_par_blocks=2)
    # 128 MiB parts (v5e / v6e): bigger tiles amortize per-grid-step overhead.
    return dict(vmem_limit=96 * 1024 * 1024, tm=512, tk=1024, tn=128,
                te=256, min_par_blocks=1)


def _cfg():
    global _CFG
    if _CFG is None:
        _CFG = _hw_config()
    return _CFG


def _pick_tile(dim, preferred, *, lane=False, min_blocks=1):
    """Tile dividing `dim`: lane axes only get 128-multiples or the full dim;
    sublane axes prefer 128-multiples, then 8-multiples, then the full dim."""
    cap = min(preferred, dim)
    if min_blocks > 1:
        cap = min(cap, max(1, dim // min_blocks))
    aligns = (128,) if lane else (128, 8)
    for a in aligns:
        if a > cap:
            continue
        t = (cap // a) * a
        while t >= a:
            if dim % t == 0:
                return t
            t -= a
    return dim


# ----------------------------------------------------------------------------
# Kernel 1a: hoisted XW = X_t @ W  (bf16 in, bf16 out, f32 MXU accumulate)
# ----------------------------------------------------------------------------
def _xw_kernel(x_ref, w_ref, o_ref):
    o_ref[0] = jnp.dot(x_ref[0], w_ref[...],
                       preferred_element_type=jnp.float32).astype(o_ref.dtype)


def structural_xw(feats, w, cfg):
    T, N, Fin = feats.shape
    Fp = w.shape[-1]
    tn = _pick_tile(N, cfg["tm"], lane=False)
    return pl.pallas_call(
        _xw_kernel,
        out_shape=jax.ShapeDtypeStruct((T, N, Fp), _MXU_DTYPE),
        grid_spec=pltpu.PrefetchScalarGridSpec(
            num_scalar_prefetch=0,
            grid=(T, N // tn),
            in_specs=[
                pl.BlockSpec((1, tn, Fin), lambda t, n: (t, n, 0)),
                pl.BlockSpec((Fin, Fp), lambda t, n: (0, 0)),
            ],
            out_specs=pl.BlockSpec((1, tn, Fp), lambda t, n: (t, n, 0)),
        ),
        compiler_params=pltpu.CompilerParams(
            dimension_semantics=("parallel", "parallel"),
            vmem_limit_bytes=cfg["vmem_limit"]),
    )(feats, w)


# ----------------------------------------------------------------------------
# Kernel 1b: structural aggregation per timestep: ReLU(A_t @ XW_t + b)
# Tiled over (t, m, k); k is the contraction over adjacency columns.
# ----------------------------------------------------------------------------
def _gcn_agg_kernel(a_ref, xw_ref, b_ref, o_ref, acc_ref):
    k = pl.program_id(2)

    @pl.when(k == 0)
    def _():
        acc_ref[...] = jnp.zeros_like(acc_ref)

    acc_ref[...] += jnp.dot(a_ref[0], xw_ref[0],
                            preferred_element_type=jnp.float32)     # (tm, Fp)

    @pl.when(k == pl.num_programs(2) - 1)
    def _():
        o_ref[0] = jnp.maximum(acc_ref[...] + b_ref[...], 0.0).astype(o_ref.dtype)


def structural_aggregate(adj, xw, b, cfg):
    T, N, _ = adj.shape
    Fp = xw.shape[-1]
    tm = _pick_tile(N, cfg["tm"], lane=False)
    tk = _pick_tile(N, cfg["tk"], lane=True)
    return pl.pallas_call(
        _gcn_agg_kernel,
        out_shape=jax.ShapeDtypeStruct((T, N, Fp), _MXU_DTYPE),
        grid_spec=pltpu.PrefetchScalarGridSpec(
            num_scalar_prefetch=0,
            grid=(T, N // tm, N // tk),
            in_specs=[
                pl.BlockSpec((1, tm, tk), lambda t, m, k: (t, m, k)),
                pl.BlockSpec((1, tk, Fp), lambda t, m, k: (t, k, 0)),
                pl.BlockSpec((1, Fp), lambda t, m, k: (0, 0)),
            ],
            out_specs=pl.BlockSpec((1, tm, Fp), lambda t, m, k: (t, m, 0)),
            scratch_shapes=[pltpu.VMEM((tm, Fp), jnp.float32)],
        ),
        compiler_params=pltpu.CompilerParams(
            dimension_semantics=("parallel", "parallel", "arbitrary"),
            vmem_limit_bytes=cfg["vmem_limit"]),
    )(adj, xw, b)


# ----------------------------------------------------------------------------
# Kernel 2: temporal (causal) self-attention over T, gridded over node blocks.
# Only the last-timestep query is computed (the only row used downstream); the
# causal mask for it is trivially all-true.  Online softmax over T bounds live
# intermediates (no (T, tn, 2F) KV tensor, no lane-crossing slices).
# ----------------------------------------------------------------------------
def _temporal_attn_kernel(h_ref, wq_ref, wk_ref, wv_ref, o_ref, *, scale):
    T, tn, Fp = h_ref.shape
    wk = wk_ref[...]
    wv = wv_ref[...]
    q = jnp.dot(h_ref[T - 1], wq_ref[...],
                preferred_element_type=jnp.float32)                  # (tn, Fp)

    def step(t, carry):
        m, l, acc = carry
        h_t = h_ref[t]                                               # (tn, Fp) bf16
        k_t = jnp.dot(h_t, wk, preferred_element_type=jnp.float32)
        v_t = jnp.dot(h_t, wv, preferred_element_type=jnp.float32)
        s_t = jnp.sum(k_t * q, axis=-1, keepdims=True) * scale       # (tn, 1)
        m_new = jnp.maximum(m, s_t)
        alpha = jnp.exp(m - m_new)
        p = jnp.exp(s_t - m_new)
        return m_new, alpha * l + p, alpha * acc + p * v_t

    m0 = jnp.full((tn, 1), -jnp.inf, jnp.float32)
    l0 = jnp.zeros((tn, 1), jnp.float32)
    acc0 = jnp.zeros((tn, Fp), jnp.float32)
    _, l, acc = lax.fori_loop(0, T, step, (m0, l0, acc0), unroll=True)
    o_ref[...] = (acc * pl.reciprocal(l, approx=True)).astype(o_ref.dtype)


def temporal_attention_last(hs, wq, wk, wv, scale, cfg):
    T, N, Fp = hs.shape
    tn = _pick_tile(N, cfg["tn"], lane=False, min_blocks=cfg["min_par_blocks"])
    kernel = functools.partial(_temporal_attn_kernel, scale=scale)
    return pl.pallas_call(
        kernel,
        out_shape=jax.ShapeDtypeStruct((N, Fp), jnp.float32),
        grid_spec=pltpu.PrefetchScalarGridSpec(
            num_scalar_prefetch=0,
            grid=(N // tn,),
            in_specs=[
                pl.BlockSpec((T, tn, Fp), lambda n: (0, n, 0)),
                pl.BlockSpec((Fp, Fp), lambda n: (0, 0)),
                pl.BlockSpec((Fp, Fp), lambda n: (0, 0)),
                pl.BlockSpec((Fp, Fp), lambda n: (0, 0)),
            ],
            out_specs=pl.BlockSpec((tn, Fp), lambda n: (n, 0)),
        ),
        compiler_params=pltpu.CompilerParams(
            dimension_semantics=("parallel",),
            vmem_limit_bytes=cfg["vmem_limit"]),
    )(hs, wq, wk, wv)


# ----------------------------------------------------------------------------
# Kernel 3: 2-layer MLP edge classifier on input_emb = emb[src] * emb[tgt].
# The endpoint gather + hadamard product is done with an XLA gather in the
# wrapper (replaces the per-row HBM DMA gather).  H and C are 128-padded so
# both matmuls and the output stores are lane-dense; padded logits are zero
# and sliced off outside.
# ----------------------------------------------------------------------------
def _edge_mlp_kernel(x_ref, w1_ref, b1_ref, w2_ref, b2_ref, o_ref):
    h = jnp.dot(x_ref[...], w1_ref[...],
                preferred_element_type=jnp.float32) + b1_ref[...]
    h = jnp.maximum(h, 0.0)
    o_ref[...] = jnp.dot(h.astype(_MXU_DTYPE), w2_ref[...],
                         preferred_element_type=jnp.float32) + b2_ref[...]


def edge_classifier(x, w1, b1, w2, b2, n_classes, cfg):
    E, Fp = x.shape
    Hp = w1.shape[-1]
    Cp = w2.shape[-1]
    te = _pick_tile(E, cfg["te"], lane=False, min_blocks=cfg["min_par_blocks"])
    out = pl.pallas_call(
        _edge_mlp_kernel,
        out_shape=jax.ShapeDtypeStruct((E, Cp), jnp.float32),
        grid_spec=pltpu.PrefetchScalarGridSpec(
            num_scalar_prefetch=0,
            grid=(E // te,),
            in_specs=[
                pl.BlockSpec((te, Fp), lambda e: (e, 0)),
                pl.BlockSpec((Fp, Hp), lambda e: (0, 0)),
                pl.BlockSpec((1, Hp), lambda e: (0, 0)),
                pl.BlockSpec((Hp, Cp), lambda e: (0, 0)),
                pl.BlockSpec((1, Cp), lambda e: (0, 0)),
            ],
            out_specs=pl.BlockSpec((te, Cp), lambda e: (e, 0)),
        ),
        compiler_params=pltpu.CompilerParams(
            dimension_semantics=("parallel",),
            vmem_limit_bytes=cfg["vmem_limit"]),
    )(x, w1, b1, w2, b2)
    return out[:, :n_classes]


# ----------------------------------------------------------------------------
# Full forward = _My_DGNN.forward
# ----------------------------------------------------------------------------
@jax.jit
def my_dgnn_forward(adj, feats, nids, params):
    cfg = _cfg()
    F = params["w_gcn"].shape[-1]
    H = params["w1"].shape[-1]
    C = params["w2"].shape[-1]
    Fp = _LANE * pl.cdiv(F, _LANE)
    Hp = _LANE * pl.cdiv(H, _LANE)
    Cp = _LANE * pl.cdiv(C, _LANE)
    pf, ph, pc = Fp - F, Hp - H, Cp - C

    # Zero-pad to lane-dense widths + bf16 on the wire (exact: padded lanes
    # stay zero through every layer and are sliced off at the very end).
    w_gcn = jnp.pad(params["w_gcn"], ((0, 0), (0, pf))).astype(_MXU_DTYPE)
    b_gcn = jnp.pad(params["b_gcn"], ((0, 0), (0, pf)))
    wq = jnp.pad(params["wq"], ((0, pf), (0, pf))).astype(_MXU_DTYPE)
    wk = jnp.pad(params["wk"], ((0, pf), (0, pf))).astype(_MXU_DTYPE)
    wv = jnp.pad(params["wv"], ((0, pf), (0, pf))).astype(_MXU_DTYPE)
    w1 = jnp.pad(params["w1"], ((0, pf), (0, ph))).astype(_MXU_DTYPE)
    b1 = jnp.pad(params["b1"], ((0, 0), (0, ph)))
    w2 = jnp.pad(params["w2"], ((0, ph), (0, pc))).astype(_MXU_DTYPE)
    b2 = jnp.pad(params["b2"], ((0, 0), (0, pc)))

    # DySAT structural layer: hoisted XW, then A @ XW (bf16 MXU, f32 acc).
    xw = structural_xw(feats.astype(_MXU_DTYPE), w_gcn, cfg)            # (T,N,Fp)
    hs = structural_aggregate(adj.astype(_MXU_DTYPE), xw, b_gcn, cfg)   # (T,N,Fp)
    # DySAT temporal self-attention; only final_emb[:, -1, :] is consumed
    # downstream, so the kernel emits (N, Fp) directly.
    emb = temporal_attention_last(hs, wq, wk, wv, 1.0 / float(F) ** 0.5, cfg)
    # _My_DGNN: gather edge endpoints + hadamard product (XLA gather), classify.
    x = (emb[nids[:, 0]] * emb[nids[:, 1]]).astype(_MXU_DTYPE)          # (E, Fp)
    return edge_classifier(x, w1, b1, w2, b2, C, cfg)


def init_params(key, fin, f, hidden, classes):
    ks = jax.random.split(key, 7)
    sc = 0.1
    return {
        "w_gcn": sc * jax.random.normal(ks[0], (fin, f), jnp.float32),
        "b_gcn": jnp.zeros((1, f), jnp.float32),
        "wq": sc * jax.random.normal(ks[1], (f, f), jnp.float32),
        "wk": sc * jax.random.normal(ks[2], (f, f), jnp.float32),
        "wv": sc * jax.random.normal(ks[3], (f, f), jnp.float32),
        "w1": sc * jax.random.normal(ks[4], (f, hidden), jnp.float32),
        "b1": jnp.zeros((1, hidden), jnp.float32),
        "w2": sc * jax.random.normal(ks[5], (hidden, classes), jnp.float32),
        "b2": jnp.zeros((1, classes), jnp.float32),
    }


if __name__ == "__main__":
    key = jax.random.PRNGKey(0)
    N, T, Fin, F, E, HID, C = 16, 4, 8, 32, 8, 32, 2

    k_adj, k_feat, k_nid, k_par = jax.random.split(key, 4)

    # dense per-timestep adjacency with self-loops, row-normalized
    adj_raw = (jax.random.uniform(k_adj, (T, N, N)) < 0.2).astype(jnp.float32)
    eye = jnp.eye(N, dtype=jnp.float32)[None]
    adj = adj_raw + eye
    adj = adj / jnp.sum(adj, axis=-1, keepdims=True)

    feats = jax.random.normal(k_feat, (T, N, Fin), jnp.float32)
    nids = jax.random.randint(k_nid, (E, 2), 0, N, dtype=jnp.int32)
    params = init_params(k_par, Fin, F, HID, C)

    logits = my_dgnn_forward(adj, feats, nids, params)
    jax.block_until_ready(logits)
    assert logits.shape == (E, C) and logits.dtype == jnp.float32
    print("KERNEL_OK")
</pallas_src>

<mosaic_0001>
module attributes {stable_mosaic.version = 11 : i64} {
  func.func @_xw_kernel(%arg0: i32, %arg1: i32, %arg2: memref<1x16x8xbf16, #tpu.memory_space<vmem>>, %arg3: memref<8x128xbf16, #tpu.memory_space<vmem>>, %arg4: memref<1x16x128xbf16, #tpu.memory_space<vmem>>) attributes {dimension_semantics = [#tpu.dimension_semantics<parallel>, #tpu.dimension_semantics<parallel>], iteration_bounds = array<i64: 4, 1>, scalar_prefetch = 0 : i64, scratch_operands = 0 : i64, tpu.core_type = #tpu.core_type<tc>, window_params = [{transform_indices = @transform_0, window_bounds = array<i64: 1, 16, 8>}, {pipeline_mode = #tpu.pipeline_mode<synchronous>, transform_indices = @transform_1, window_bounds = array<i64: 8, 128>}, {transform_indices = @transform_2, window_bounds = array<i64: 1, 16, 128>}]} {
    %c0 = arith.constant 0 : index
    %c0_0 = arith.constant 0 : index
    %c0_1 = arith.constant 0 : index
    %0 = vector.load %arg2[%c0, %c0_0, %c0_1] : memref<1x16x8xbf16, #tpu.memory_space<vmem>>, vector<1x16x8xbf16>
    %1 = vector.shape_cast %0 : vector<1x16x8xbf16> to vector<16x8xbf16>
    %c0_2 = arith.constant 0 : index
    %c0_3 = arith.constant 0 : index
    %2 = vector.load %arg3[%c0_2, %c0_3] : memref<8x128xbf16, #tpu.memory_space<vmem>>, vector<8x128xbf16>
    %cst = arith.constant dense<0.000000e+00> : vector<16x128xf32>
    %3 = tpu.matmul %1, %2, %cst {dimension_numbers = #tpu.dot_dimension_numbers<[1], [0], [0], [1], [0, 0, 1, 1], [], []>} : vector<16x8xbf16>, vector<8x128xbf16>, vector<16x128xf32> -> vector<16x128xf32>
    %4 = arith.truncf %3 : vector<16x128xf32> to vector<16x128xbf16>
    %c0_4 = arith.constant 0 : index
    %c0_5 = arith.constant 0 : index
    %c0_6 = arith.constant 0 : index
    %5 = vector.load %arg4[%c0_4, %c0_5, %c0_6] : memref<1x16x128xbf16, #tpu.memory_space<vmem>>, vector<1x16x128xbf16>
    %6 = vector.shape_cast %5 : vector<1x16x128xbf16> to vector<16x128xbf16>
    %7 = vector.shape_cast %4 : vector<16x128xbf16> to vector<1x16x128xbf16>
    tpu.vector_store %arg4[%c0_4, %c0_5, %c0_6], %7 {strides = array<i32>} : memref<1x16x128xbf16, #tpu.memory_space<vmem>>, vector<1x16x128xbf16>,
    return
  }
  func.func @transform_0(%arg0: i32, %arg1: i32) -> (i32, i32, i32) {
    %c0_i32 = arith.constant 0 : i32
    %c0_i32_0 = arith.constant 0 : i32
    return %arg0, %arg1, %c0_i32 : i32, i32, i32
  }
  func.func @transform_1(%arg0: i32, %arg1: i32) -> (i32, i32) {
    %c0_i32 = arith.constant 0 : i32
    %c0_i32_0 = arith.constant 0 : i32
    %c0_i32_1 = arith.constant 0 : i32
    return %c0_i32, %c0_i32_0 : i32, i32
  }
  func.func @transform_2(%arg0: i32, %arg1: i32) -> (i32, i32, i32) {
    %c0_i32 = arith.constant 0 : i32
    %c0_i32_0 = arith.constant 0 : i32
    return %arg0, %arg1, %c0_i32 : i32, i32, i32
  }
}

module attributes {stable_mosaic.version = 11 : i64} {
  func.func @_gcn_agg_kernel(%arg0: i32, %arg1: i32, %arg2: i32, %arg3: memref<1x16x16xbf16, #tpu.memory_space<vmem>>, %arg4: memref<1x16x128xbf16, #tpu.memory_space<vmem>>, %arg5: memref<1x128xf32, #tpu.memory_space<vmem>>, %arg6: memref<1x16x128xbf16, #tpu.memory_space<vmem>>, %arg7: memref<16x128xf32, #tpu.memory_space<vmem>>) attributes {dimension_semantics = [#tpu.dimension_semantics<parallel>, #tpu.dimension_semantics<parallel>, #tpu.dimension_semantics<arbitrary>], iteration_bounds = array<i64: 4, 1, 1>, scalar_prefetch = 0 : i64, scratch_operands = 1 : i64, tpu.core_type = #tpu.core_type<tc>, window_params = [{transform_indices = @transform_0, window_bounds = array<i64: 1, 16, 16>}, {transform_indices = @transform_1, window_bounds = array<i64: 1, 16, 128>}, {pipeline_mode = #tpu.pipeline_mode<synchronous>, transform_indices = @transform_2, window_bounds = array<i64: 1, 128>}, {transform_indices = @transform_3, window_bounds = array<i64: 1, 16, 128>}]} {
    %c0_i32 = arith.constant 0 : i32
    %0 = arith.cmpi eq, %arg2, %c0_i32 : i32
    %1 = arith.extui %0 : i1 to i32
    %c0_i32_0 = arith.constant 0 : i32
    %2 = arith.cmpi ne, %1, %c0_i32_0 : i32
    scf.if %2 {
      %cst_12 = arith.constant 0.000000e+00 : f32
      %14 = vector.broadcast %cst_12 : f32 to vector<16x128xf32>
      %c0_13 = arith.constant 0 : index
      %c0_14 = arith.constant 0 : index
      %15 = vector.load %arg7[%c0_13, %c0_14] : memref<16x128xf32, #tpu.memory_space<vmem>>, vector<16x128xf32>
      tpu.vector_store %arg7[%c0_13, %c0_14], %14 {strides = array<i32>} : memref<16x128xf32, #tpu.memory_space<vmem>>, vector<16x128xf32>,
    } else {
    }
    %c0 = arith.constant 0 : index
    %c0_1 = arith.constant 0 : index
    %3 = vector.load %arg7[%c0, %c0_1] : memref<16x128xf32, #tpu.memory_space<vmem>>, vector<16x128xf32>
    %c0_2 = arith.constant 0 : index
    %c0_3 = arith.constant 0 : index
    %c0_4 = arith.constant 0 : index
    %4 = vector.load %arg3[%c0_2, %c0_3, %c0_4] : memref<1x16x16xbf16, #tpu.memory_space<vmem>>, vector<1x16x16xbf16>
    %5 = vector.shape_cast %4 : vector<1x16x16xbf16> to vector<16x16xbf16>
    %c0_5 = arith.constant 0 : index
    %c0_6 = arith.constant 0 : index
    %c0_7 = arith.constant 0 : index
    %6 = vector.load %arg4[%c0_5, %c0_6, %c0_7] : memref<1x16x128xbf16, #tpu.memory_space<vmem>>, vector<1x16x128xbf16>
    %7 = vector.shape_cast %6 : vector<1x16x128xbf16> to vector<16x128xbf16>
    %cst = arith.constant dense<0.000000e+00> : vector<16x128xf32>
    %8 = tpu.matmul %5, %7, %cst {dimension_numbers = #tpu.dot_dimension_numbers<[1], [0], [0], [1], [0, 0, 1, 1], [], []>} : vector<16x16xbf16>, vector<16x128xbf16>, vector<16x128xf32> -> vector<16x128xf32>
    %9 = arith.addf %3, %8 : vector<16x128xf32>
    %c0_8 = arith.constant 0 : index
    %c0_9 = arith.constant 0 : index
    %10 = vector.load %arg7[%c0_8, %c0_9] : memref<16x128xf32, #tpu.memory_space<vmem>>, vector<16x128xf32>
    tpu.vector_store %arg7[%c0_8, %c0_9], %9 {strides = array<i32>} : memref<16x128xf32, #tpu.memory_space<vmem>>, vector<16x128xf32>,
    %c0_i32_10 = arith.constant 0 : i32
    %11 = arith.cmpi eq, %arg2, %c0_i32_10 : i32
    %12 = arith.extui %11 : i1 to i32
    %c0_i32_11 = arith.constant 0 : i32
    %13 = arith.cmpi ne, %12, %c0_i32_11 : i32
    scf.if %13 {
      %c0_12 = arith.constant 0 : index
      %c0_13 = arith.constant 0 : index
      %14 = vector.load %arg7[%c0_12, %c0_13] : memref<16x128xf32, #tpu.memory_space<vmem>>, vector<16x128xf32>
      %c0_14 = arith.constant 0 : index
      %c0_15 = arith.constant 0 : index
      %15 = vector.load %arg5[%c0_14, %c0_15] : memref<1x128xf32, #tpu.memory_space<vmem>>, vector<1x128xf32>
      %16 = vector.broadcast %15 : vector<1x128xf32> to vector<16x128xf32>
      %17 = arith.addf %14, %16 : vector<16x128xf32>
      %cst_16 = arith.constant 0.000000e+00 : f32
      %18 = vector.broadcast %cst_16 : f32 to vector<16x128xf32>
      %19 = arith.maximumf %17, %18 : vector<16x128xf32>
      %20 = arith.truncf %19 : vector<16x128xf32> to vector<16x128xbf16>
      %c0_17 = arith.constant 0 : index
      %c0_18 = arith.constant 0 : index
      %c0_19 = arith.constant 0 : index
      %21 = vector.load %arg6[%c0_17, %c0_18, %c0_19] : memref<1x16x128xbf16, #tpu.memory_space<vmem>>, vector<1x16x128xbf16>
      %22 = vector.shape_cast %21 : vector<1x16x128xbf16> to vector<16x128xbf16>
      %23 = vector.shape_cast %20 : vector<16x128xbf16> to vector<1x16x128xbf16>
      tpu.vector_store %arg6[%c0_17, %c0_18, %c0_19], %23 {strides = array<i32>} : memref<1x16x128xbf16, #tpu.memory_space<vmem>>, vector<1x16x128xbf16>,
    } else {
    }
    return
  }
  func.func @transform_0(%arg0: i32, %arg1: i32, %arg2: i32) -> (i32, i32, i32) {
    %c0_i32 = arith.constant 0 : i32
    return %arg0, %arg1, %arg2 : i32, i32, i32
  }
  func.func @transform_1(%arg0: i32, %arg1: i32, %arg2: i32) -> (i32, i32, i32) {
    %c0_i32 = arith.constant 0 : i32
    %c0_i32_0 = arith.constant 0 : i32
    return %arg0, %arg2, %c0_i32 : i32, i32, i32
  }
  func.func @transform_2(%arg0: i32, %arg1: i32, %arg2: i32) -> (i32, i32) {
    %c0_i32 = arith.constant 0 : i32
    %c0_i32_0 = arith.constant 0 : i32
    %c0_i32_1 = arith.constant 0 : i32
    return %c0_i32, %c0_i32_0 : i32, i32
  }
  func.func @transform_3(%arg0: i32, %arg1: i32, %arg2: i32) -> (i32, i32, i32) {
    %c0_i32 = arith.constant 0 : i32
    %c0_i32_0 = arith.constant 0 : i32
    return %arg0, %arg1, %c0_i32 : i32, i32, i32
  }
}

module attributes {stable_mosaic.version = 11 : i64} {
  func.func @_temporal_attn_kernel(%arg0: i32, %arg1: memref<4x16x128xbf16, #tpu.memory_space<vmem>>, %arg2: memref<128x128xbf16, #tpu.memory_space<vmem>>, %arg3: memref<128x128xbf16, #tpu.memory_space<vmem>>, %arg4: memref<128x128xbf16, #tpu.memory_space<vmem>>, %arg5: memref<16x128xf32, #tpu.memory_space<vmem>>) attributes {dimension_semantics = [#tpu.dimension_semantics<parallel>], iteration_bounds = array<i64: 1>, scalar_prefetch = 0 : i64, scratch_operands = 0 : i64, tpu.core_type = #tpu.core_type<tc>, window_params = [{transform_indices = @transform_0, window_bounds = array<i64: 4, 16, 128>}, {pipeline_mode = #tpu.pipeline_mode<synchronous>, transform_indices = @transform_1, window_bounds = array<i64: 128, 128>}, {pipeline_mode = #tpu.pipeline_mode<synchronous>, transform_indices = @transform_2, window_bounds = array<i64: 128, 128>}, {pipeline_mode = #tpu.pipeline_mode<synchronous>, transform_indices = @transform_3, window_bounds = array<i64: 128, 128>}, {transform_indices = @transform_4, window_bounds = array<i64: 16, 128>}]} {
    %c0 = arith.constant 0 : index
    %c0_0 = arith.constant 0 : index
    %0 = vector.load %arg3[%c0, %c0_0] : memref<128x128xbf16, #tpu.memory_space<vmem>>, vector<128x128xbf16>
    %c0_1 = arith.constant 0 : index
    %c0_2 = arith.constant 0 : index
    %1 = vector.load %arg4[%c0_1, %c0_2] : memref<128x128xbf16, #tpu.memory_space<vmem>>, vector<128x128xbf16>
    %c3 = arith.constant 3 : index
    %c0_3 = arith.constant 0 : index
    %c0_4 = arith.constant 0 : index
    %2 = vector.load %arg1[%c3, %c0_3, %c0_4] : memref<4x16x128xbf16, #tpu.memory_space<vmem>>, vector<1x16x128xbf16>
    %3 = vector.shape_cast %2 : vector<1x16x128xbf16> to vector<16x128xbf16>
    %c0_5 = arith.constant 0 : index
    %c0_6 = arith.constant 0 : index
    %4 = vector.load %arg2[%c0_5, %c0_6] : memref<128x128xbf16, #tpu.memory_space<vmem>>, vector<128x128xbf16>
    %cst = arith.constant dense<0.000000e+00> : vector<16x128xf32>
    %5 = tpu.matmul %3, %4, %cst {dimension_numbers = #tpu.dot_dimension_numbers<[1], [0], [0], [1], [0, 0, 1, 1], [], []>} : vector<16x128xbf16>, vector<128x128xbf16>, vector<16x128xf32> -> vector<16x128xf32>
    %cst_7 = arith.constant 0xFF800000 : f32
    %6 = vector.broadcast %cst_7 : f32 to vector<16x1xf32>
    %cst_8 = arith.constant 0.000000e+00 : f32
    %7 = vector.broadcast %cst_8 : f32 to vector<16x1xf32>
    %cst_9 = arith.constant 0.000000e+00 : f32
    %8 = vector.broadcast %cst_9 : f32 to vector<16x128xf32>
    %c0_i32 = arith.constant 0 : i32
    %9 = arith.index_cast %c0_i32 : i32 to index
    %c0_10 = arith.constant 0 : index
    %c0_11 = arith.constant 0 : index
    %10 = vector.load %arg1[%9, %c0_10, %c0_11] : memref<4x16x128xbf16, #tpu.memory_space<vmem>>, vector<1x16x128xbf16>
    %11 = vector.shape_cast %10 : vector<1x16x128xbf16> to vector<16x128xbf16>
    %cst_12 = arith.constant dense<0.000000e+00> : vector<16x128xf32>
    %12 = tpu.matmul %11, %0, %cst_12 {dimension_numbers = #tpu.dot_dimension_numbers<[1], [0], [0], [1], [0, 0, 1, 1], [], []>} : vector<16x128xbf16>, vector<128x128xbf16>, vector<16x128xf32> -> vector<16x128xf32>
    %cst_13 = arith.constant dense<0.000000e+00> : vector<16x128xf32>
    %13 = tpu.matmul %11, %1, %cst_13 {dimension_numbers = #tpu.dot_dimension_numbers<[1], [0], [0], [1], [0, 0, 1, 1], [], []>} : vector<16x128xbf16>, vector<128x128xbf16>, vector<16x128xf32> -> vector<16x128xf32>
    %14 = arith.mulf %12, %5 : vector<16x128xf32>
    %cst_14 = arith.constant dense<0.000000e+00> : vector<16xf32>
    %15 = vector.multi_reduction <add>, %14, %cst_14 [1] : vector<16x128xf32> to vector<16xf32>
    %16 = vector.shape_cast %15 : vector<16xf32> to vector<16x1xf32>
    %cst_15 = arith.constant 0.176776692 : f32
    %17 = vector.broadcast %cst_15 : f32 to vector<16x1xf32>
    %18 = arith.mulf %16, %17 : vector<16x1xf32>
    %19 = arith.maximumf %6, %18 : vector<16x1xf32>
    %20 = arith.subf %6, %19 : vector<16x1xf32>
    %21 = math.exp %20 : vector<16x1xf32>
    %22 = arith.subf %18, %19 : vector<16x1xf32>
    %23 = math.exp %22 : vector<16x1xf32>
    %24 = arith.mulf %21, %7 : vector<16x1xf32>
    %25 = arith.addf %24, %23 : vector<16x1xf32>
    %26 = vector.broadcast %21 : vector<16x1xf32> to vector<16x128xf32>
    %27 = arith.mulf %26, %8 : vector<16x128xf32>
    %28 = vector.broadcast %23 : vector<16x1xf32> to vector<16x128xf32>
    %29 = arith.mulf %28, %13 : vector<16x128xf32>
    %30 = arith.addf %27, %29 : vector<16x128xf32>
    %c1_i32 = arith.constant 1 : i32
    %31 = arith.index_cast %c1_i32 : i32 to index
    %c0_16 = arith.constant 0 : index
    %c0_17 = arith.constant 0 : index
    %32 = vector.load %arg1[%31, %c0_16, %c0_17] : memref<4x16x128xbf16, #tpu.memory_space<vmem>>, vector<1x16x128xbf16>
    %33 = vector.shape_cast %32 : vector<1x16x128xbf16> to vector<16x128xbf16>
    %cst_18 = arith.constant dense<0.000000e+00> : vector<16x128xf32>
    %34 = tpu.matmul %33, %0, %cst_18 {dimension_numbers = #tpu.dot_dimension_numbers<[1], [0], [0], [1], [0, 0, 1, 1], [], []>} : vector<16x128xbf16>, vector<128x128xbf16>, vector<16x128xf32> -> vector<16x128xf32>
    %cst_19 = arith.constant dense<0.000000e+00> : vector<16x128xf32>
    %35 = tpu.matmul %33, %1, %cst_19 {dimension_numbers = #tpu.dot_dimension_numbers<[1], [0], [0], [1], [0, 0, 1, 1], [], []>} : vector<16x128xbf16>, vector<128x128xbf16>, vector<16x128xf32> -> vector<16x128xf32>
    %36 = arith.mulf %34, %5 : vector<16x128xf32>
    %cst_20 = arith.constant dense<0.000000e+00> : vector<16xf32>
    %37 = vector.multi_reduction <add>, %36, %cst_20 [1] : vector<16x128xf32> to vector<16xf32>
    %38 = vector.shape_cast %37 : vector<16xf32> to vector<16x1xf32>
    %cst_21 = arith.constant 0.176776692 : f32
    %39 = vector.broadcast %cst_21 : f32 to vector<16x1xf32>
    %40 = arith.mulf %38, %39 : vector<16x1xf32>
    %41 = arith.maximumf %19, %40 : vector<16x1xf32>
    %42 = arith.subf %19, %41 : vector<16x1xf32>
    %43 = math.exp %42 : vector<16x1xf32>
    %44 = arith.subf %40, %41 : vector<16x1xf32>
    %45 = math.exp %44 : vector<16x1xf32>
    %46 = arith.mulf %43, %25 : vector<16x1xf32>
    %47 = arith.addf %46, %45 : vector<16x1xf32>
    %48 = vector.broadcast %43 : vector<16x1xf32> to vector<16x128xf32>
    %49 = arith.mulf %48, %30 : vector<16x128xf32>
    %50 = vector.broadcast %45 : vector<16x1xf32> to vector<16x128xf32>
    %51 = arith.mulf %50, %35 : vector<16x128xf32>
    %52 = arith.addf %49, %51 : vector<16x128xf32>
    %c2_i32 = arith.constant 2 : i32
    %53 = arith.index_cast %c2_i32 : i32 to index
    %c0_22 = arith.constant 0 : index
    %c0_23 = arith.constant 0 : index
    %54 = vector.load %arg1[%53, %c0_22, %c0_23] : memref<4x16x128xbf16, #tpu.memory_space<vmem>>, vector<1x16x128xbf16>
    %55 = vector.shape_cast %54 : vector<1x16x128xbf16> to vector<16x128xbf16>
    %cst_24 = arith.constant dense<0.000000e+00> : vector<16x128xf32>
    %56 = tpu.matmul %55, %0, %cst_24 {dimension_numbers = #tpu.dot_dimension_numbers<[1], [0], [0], [1], [0, 0, 1, 1], [], []>} : vector<16x128xbf16>, vector<128x128xbf16>, vector<16x128xf32> -> vector<16x128xf32>
    %cst_25 = arith.constant dense<0.000000e+00> : vector<16x128xf32>
    %57 = tpu.matmul %55, %1, %cst_25 {dimension_numbers = #tpu.dot_dimension_numbers<[1], [0], [0], [1], [0, 0, 1, 1], [], []>} : vector<16x128xbf16>, vector<128x128xbf16>, vector<16x128xf32> -> vector<16x128xf32>
    %58 = arith.mulf %56, %5 : vector<16x128xf32>
    %cst_26 = arith.constant dense<0.000000e+00> : vector<16xf32>
    %59 = vector.multi_reduction <add>, %58, %cst_26 [1] : vector<16x128xf32> to vector<16xf32>
    %60 = vector.shape_cast %59 : vector<16xf32> to vector<16x1xf32>
    %cst_27 = arith.constant 0.176776692 : f32
    %61 = vector.broadcast %cst_27 : f32 to vector<16x1xf32>
    %62 = arith.mulf %60, %61 : vector<16x1xf32>
    %63 = arith.maximumf %41, %62 : vector<16x1xf32>
    %64 = arith.subf %41, %63 : vector<16x1xf32>
    %65 = math.exp %64 : vector<16x1xf32>
    %66 = arith.subf %62, %63 : vector<16x1xf32>
    %67 = math.exp %66 : vector<16x1xf32>
    %68 = arith.mulf %65, %47 : vector<16x1xf32>
    %69 = arith.addf %68, %67 : vector<16x1xf32>
    %70 = vector.broadcast %65 : vector<16x1xf32> to vector<16x128xf32>
    %71 = arith.mulf %70, %52 : vector<16x128xf32>
    %72 = vector.broadcast %67 : vector<16x1xf32> to vector<16x128xf32>
    %73 = arith.mulf %72, %57 : vector<16x128xf32>
    %74 = arith.addf %71, %73 : vector<16x128xf32>
    %c3_i32 = arith.constant 3 : i32
    %75 = arith.index_cast %c3_i32 : i32 to index
    %c0_28 = arith.constant 0 : index
    %c0_29 = arith.constant 0 : index
    %76 = vector.load %arg1[%75, %c0_28, %c0_29] : memref<4x16x128xbf16, #tpu.memory_space<vmem>>, vector<1x16x128xbf16>
    %77 = vector.shape_cast %76 : vector<1x16x128xbf16> to vector<16x128xbf16>
    %cst_30 = arith.constant dense<0.000000e+00> : vector<16x128xf32>
    %78 = tpu.matmul %77, %0, %cst_30 {dimension_numbers = #tpu.dot_dimension_numbers<[1], [0], [0], [1], [0, 0, 1, 1], [], []>} : vector<16x128xbf16>, vector<128x128xbf16>, vector<16x128xf32> -> vector<16x128xf32>
    %cst_31 = arith.constant dense<0.000000e+00> : vector<16x128xf32>
    %79 = tpu.matmul %77, %1, %cst_31 {dimension_numbers = #tpu.dot_dimension_numbers<[1], [0], [0], [1], [0, 0, 1, 1], [], []>} : vector<16x128xbf16>, vector<128x128xbf16>, vector<16x128xf32> -> vector<16x128xf32>
    %80 = arith.mulf %78, %5 : vector<16x128xf32>
    %cst_32 = arith.constant dense<0.000000e+00> : vector<16xf32>
    %81 = vector.multi_reduction <add>, %80, %cst_32 [1] : vector<16x128xf32> to vector<16xf32>
    %82 = vector.shape_cast %81 : vector<16xf32> to vector<16x1xf32>
    %cst_33 = arith.constant 0.176776692 : f32
    %83 = vector.broadcast %cst_33 : f32 to vector<16x1xf32>
    %84 = arith.mulf %82, %83 : vector<16x1xf32>
    %85 = arith.maximumf %63, %84 : vector<16x1xf32>
    %86 = arith.subf %63, %85 : vector<16x1xf32>
    %87 = math.exp %86 : vector<16x1xf32>
    %88 = arith.subf %84, %85 : vector<16x1xf32>
    %89 = math.exp %88 : vector<16x1xf32>
    %90 = arith.mulf %87, %69 : vector<16x1xf32>
    %91 = arith.addf %90, %89 : vector<16x1xf32>
    %92 = vector.broadcast %87 : vector<16x1xf32> to vector<16x128xf32>
    %93 = arith.mulf %92, %74 : vector<16x128xf32>
    %94 = vector.broadcast %89 : vector<16x1xf32> to vector<16x128xf32>
    %95 = arith.mulf %94, %79 : vector<16x128xf32>
    %96 = arith.addf %93, %95 : vector<16x128xf32>
    %c4_i32 = arith.constant 4 : i32
    %97 = tpu.reciprocal %91 {approx = true} : vector<16x1xf32> -> vector<16x1xf32>
    %98 = vector.broadcast %97 : vector<16x1xf32> to vector<16x128xf32>
    %99 = arith.mulf %96, %98 : vector<16x128xf32>
    %c0_34 = arith.constant 0 : index
    %c0_35 = arith.constant 0 : index
    %100 = vector.load %arg5[%c0_34, %c0_35] : memref<16x128xf32, #tpu.memory_space<vmem>>, vector<16x128xf32>
    tpu.vector_store %arg5[%c0_34, %c0_35], %99 {strides = array<i32>} : memref<16x128xf32, #tpu.memory_space<vmem>>, vector<16x128xf32>,
    return
  }
  func.func @transform_0(%arg0: i32) -> (i32, i32, i32) {
    %c0_i32 = arith.constant 0 : i32
    %c0_i32_0 = arith.constant 0 : i32
    %c0_i32_1 = arith.constant 0 : i32
    return %c0_i32, %arg0, %c0_i32_0 : i32, i32, i32
  }
  func.func @transform_1(%arg0: i32) -> (i32, i32) {
    %c0_i32 = arith.constant 0 : i32
    %c0_i32_0 = arith.constant 0 : i32
    %c0_i32_1 = arith.constant 0 : i32
    return %c0_i32, %c0_i32_0 : i32, i32
  }
  func.func @transform_2(%arg0: i32) -> (i32, i32) {
    %c0_i32 = arith.constant 0 : i32
    %c0_i32_0 = arith.constant 0 : i32
    %c0_i32_1 = arith.constant 0 : i32
    return %c0_i32, %c0_i32_0 : i32, i32
  }
  func.func @transform_3(%arg0: i32) -> (i32, i32) {
    %c0_i32 = arith.constant 0 : i32
    %c0_i32_0 = arith.constant 0 : i32
    %c0_i32_1 = arith.constant 0 : i32
    return %c0_i32, %c0_i32_0 : i32, i32
  }
  func.func @transform_4(%arg0: i32) -> (i32, i32) {
    %c0_i32 = arith.constant 0 : i32
    %c0_i32_0 = arith.constant 0 : i32
    return %arg0, %c0_i32 : i32, i32
  }
}

module attributes {stable_mosaic.version = 11 : i64} {
  func.func @_edge_mlp_kernel(%arg0: i32, %arg1: memref<8x128xbf16, #tpu.memory_space<vmem>>, %arg2: memref<128x128xbf16, #tpu.memory_space<vmem>>, %arg3: memref<1x128xf32, #tpu.memory_space<vmem>>, %arg4: memref<128x128xbf16, #tpu.memory_space<vmem>>, %arg5: memref<1x128xf32, #tpu.memory_space<vmem>>, %arg6: memref<8x128xf32, #tpu.memory_space<vmem>>) attributes {dimension_semantics = [#tpu.dimension_semantics<parallel>], iteration_bounds = array<i64: 1>, scalar_prefetch = 0 : i64, scratch_operands = 0 : i64, tpu.core_type = #tpu.core_type<tc>, window_params = [{transform_indices = @transform_0, window_bounds = array<i64: 8, 128>}, {pipeline_mode = #tpu.pipeline_mode<synchronous>, transform_indices = @transform_1, window_bounds = array<i64: 128, 128>}, {pipeline_mode = #tpu.pipeline_mode<synchronous>, transform_indices = @transform_2, window_bounds = array<i64: 1, 128>}, {pipeline_mode = #tpu.pipeline_mode<synchronous>, transform_indices = @transform_3, window_bounds = array<i64: 128, 128>}, {pipeline_mode = #tpu.pipeline_mode<synchronous>, transform_indices = @transform_4, window_bounds = array<i64: 1, 128>}, {transform_indices = @transform_5, window_bounds = array<i64: 8, 128>}]} {
    %c0 = arith.constant 0 : index
    %c0_0 = arith.constant 0 : index
    %0 = vector.load %arg1[%c0, %c0_0] : memref<8x128xbf16, #tpu.memory_space<vmem>>, vector<8x128xbf16>
    %c0_1 = arith.constant 0 : index
    %c0_2 = arith.constant 0 : index
    %1 = vector.load %arg2[%c0_1, %c0_2] : memref<128x128xbf16, #tpu.memory_space<vmem>>, vector<128x128xbf16>
    %cst = arith.constant dense<0.000000e+00> : vector<8x128xf32>
    %2 = tpu.matmul %0, %1, %cst {dimension_numbers = #tpu.dot_dimension_numbers<[1], [0], [0], [1], [0, 0, 1, 1], [], []>} : vector<8x128xbf16>, vector<128x128xbf16>, vector<8x128xf32> -> vector<8x128xf32>
    %c0_3 = arith.constant 0 : index
    %c0_4 = arith.constant 0 : index
    %3 = vector.load %arg3[%c0_3, %c0_4] : memref<1x128xf32, #tpu.memory_space<vmem>>, vector<1x128xf32>
    %4 = vector.broadcast %3 : vector<1x128xf32> to vector<8x128xf32>
    %5 = arith.addf %2, %4 : vector<8x128xf32>
    %cst_5 = arith.constant 0.000000e+00 : f32
    %6 = vector.broadcast %cst_5 : f32 to vector<8x128xf32>
    %7 = arith.maximumf %5, %6 : vector<8x128xf32>
    %8 = arith.truncf %7 : vector<8x128xf32> to vector<8x128xbf16>
    %c0_6 = arith.constant 0 : index
    %c0_7 = arith.constant 0 : index
    %9 = vector.load %arg4[%c0_6, %c0_7] : memref<128x128xbf16, #tpu.memory_space<vmem>>, vector<128x128xbf16>
    %cst_8 = arith.constant dense<0.000000e+00> : vector<8x128xf32>
    %10 = tpu.matmul %8, %9, %cst_8 {dimension_numbers = #tpu.dot_dimension_numbers<[1], [0], [0], [1], [0, 0, 1, 1], [], []>} : vector<8x128xbf16>, vector<128x128xbf16>, vector<8x128xf32> -> vector<8x128xf32>
    %c0_9 = arith.constant 0 : index
    %c0_10 = arith.constant 0 : index
    %11 = vector.load %arg5[%c0_9, %c0_10] : memref<1x128xf32, #tpu.memory_space<vmem>>, vector<1x128xf32>
    %12 = vector.broadcast %11 : vector<1x128xf32> to vector<8x128xf32>
    %13 = arith.addf %10, %12 : vector<8x128xf32>
    %c0_11 = arith.constant 0 : index
    %c0_12 = arith.constant 0 : index
    %14 = vector.load %arg6[%c0_11, %c0_12] : memref<8x128xf32, #tpu.memory_space<vmem>>, vector<8x128xf32>
    tpu.vector_store %arg6[%c0_11, %c0_12], %13 {strides = array<i32>} : memref<8x128xf32, #tpu.memory_space<vmem>>, vector<8x128xf32>,
    return
  }
  func.func @transform_0(%arg0: i32) -> (i32, i32) {
    %c0_i32 = arith.constant 0 : i32
    %c0_i32_0 = arith.constant 0 : i32
    return %arg0, %c0_i32 : i32, i32
  }
  func.func @transform_1(%arg0: i32) -> (i32, i32) {
    %c0_i32 = arith.constant 0 : i32
    %c0_i32_0 = arith.constant 0 : i32
    %c0_i32_1 = arith.constant 0 : i32
    return %c0_i32, %c0_i32_0 : i32, i32
  }
  func.func @transform_2(%arg0: i32) -> (i32, i32) {
    %c0_i32 = arith.constant 0 : i32
    %c0_i32_0 = arith.constant 0 : i32
    %c0_i32_1 = arith.constant 0 : i32
    return %c0_i32, %c0_i32_0 : i32, i32
  }
  func.func @transform_3(%arg0: i32) -> (i32, i32) {
    %c0_i32 = arith.constant 0 : i32
    %c0_i32_0 = arith.constant 0 : i32
    %c0_i32_1 = arith.constant 0 : i32
    return %c0_i32, %c0_i32_0 : i32, i32
  }
  func.func @transform_4(%arg0: i32) -> (i32, i32) {
    %c0_i32 = arith.constant 0 : i32
    %c0_i32_0 = arith.constant 0 : i32
    %c0_i32_1 = arith.constant 0 : i32
    return %c0_i32, %c0_i32_0 : i32, i32
  }
  func.func @transform_5(%arg0: i32) -> (i32, i32) {
    %c0_i32 = arith.constant 0 : i32
    %c0_i32_0 = arith.constant 0 : i32
    return %arg0, %c0_i32 : i32, i32
  }
}

</mosaic_0001>

<llo_original>
// kernel: my_dgnn_forward.4
$region0: #{my_dgnn_forward.4}
  #allocation0 [shape = 'u32[]', space=smem, size = 0x4, offset = 0x4, fixed_abs, tag = 'smem constant byte address 0x4 - core index']
  #allocation1 [shape = 'u32[144,128]{1,0:T(1,128)}', space=vmem, size = 0x12000, scoped, tag = 'internal scratch']
  %s0 = inlined_call_operand.hbm [shape: bf16[4,16,8], index: 0, kind: input, shape index: {}]
  %s1 = inlined_call_operand.hbm [shape: bf16[8,128], index: 1, kind: input, shape index: {}]
  %s2 = inlined_call_operand.hbm [shape: bf16[4,16,128], index: 2, kind: output, shape index: {}]
  %s3 = sld [smem:[#allocation0]]
  $region49: #{my_dgnn_forward.4} parent=0
    _
  %s5 = ssub.s32 1, %s3
  %s6 = scalar_select 0, %s5, %s3
  $region1: #{my_dgnn_forward.4} parent=0
    #allocation2 [shape = 'u8[8192]{0}', space=vmem, size = 0x2000, scoped, tag = 'input window, operand 0']
    #allocation3 [shape = 's32[2]{0}', space=sflag, size = 0x8, scoped, tag = 'scoped memory for my_dgnn_forward.4']
    #allocation4 [shape = 's32[2]{0}', space=sflag, size = 0x8, scoped, tag = 'scoped memory for my_dgnn_forward.4']
    #allocation5 [shape = 'u8[2048]{0}', space=vmem, size = 0x800, scoped, tag = 'input window, operand 1, single buffered']
    #allocation6 [shape = 's32[1]{0}', space=sflag, size = 0x4, scoped, tag = 'scoped memory for my_dgnn_forward.4']
    #allocation7 [shape = 'u8[8192]{0}', space=vmem, size = 0x2000, scoped, tag = 'output window, operand 0']
    %7 = vsyncpa [#allocation3], 0
    %s8 = scalar_lea.sflag [#allocation3], 1
    %9 = vsyncpa %s8, 0
    %10 = vsyncpa [#allocation6], 0
    %11 = vsyncpa [#allocation4], 0
    %s12 = scalar_lea.sflag [#allocation4], 1
    %13 = vsyncpa %s12, 0
    loop: start=0, step=1, limit=6
    $region2: #{my_dgnn_forward.4} parent=1 // loop_pre_header
      _
    $region3: #{my_dgnn_forward.4} parent=1 // loop_header
      %s15 = sphi 0, %s19
      %p16 = scmp.ge.s32.totalorder %s15, 6
      %s22 = sphi 0, %s34
      %s23 = sphi 0, %s30
      %s24 = sphi 0, %s22
      %s25 = sphi 0, %s23
      %s26 = sphi 0, %s24
      %s27 = sphi 0, %s25
      %s39 = sphi 0, %s41
      %s42 = sphi 0, %s39
      %s43 = sphi 0, %s42
      %s59 = sphi 0, %s43
      %s63 = sphi 0, %s63
      %s65 = sphi 0, %s63
      %s66 = sphi 0, %s65
      %s80 = sphi 0, %s66
      %s88 = sphi 0, %s90
      %s91 = sphi 0, %s88
      %s92 = sphi 0, %s91
      %s108 = sphi 0, %s92
    $region4: #{my_dgnn_forward.4} parent=1 // loop_header_branch
      %18 = sbr.rel (%p16) target = $region8
    $region5: #{my_dgnn_forward.4} parent=1 // loop_body
      %s20 = ssub.s32 %s15, 1
      %s21 = ssub.s32 %s15, 2
      %s28 = sadd.s32 1, %s23
      %p29 = scmp.ge.s32.totalorder %s28, 1
      %s30 = scalar_select %p29, 0, %s28
      %s31 = sadd.s32 1, %s22
      %s32 = scalar_select %p29, %s31, %s22
      %p33 = scmp.ge.s32.totalorder %s32, 4
      %s34 = scalar_select %p33, 0, %s32
      %s35 = ssub.s32 %s22, %s34
      %s36 = ssub.s32 %s23, %s30
      %s37 = sor.u32 %s35, %s36
      %p38 = scmp.eq.s32.totalorder %s37, 0
      %s40 = sadd.s32 %s39, 1
      %s41 = scalar_select %p38, %s39, %s40
      %p44 = pneg %p38
      %p45 = scmp.eq.s32.totalorder %s15, 3
      %p46 = por %p44, %p45
      %p47 = scmp.ne.s32.totalorder %s39, %s42
      %p48 = scmp.eq.s32.totalorder %s15, 0
      %p49 = por %p47, %p48
      %p50 = scmp.ne.s32.totalorder %s39, %s42
      %p51 = scmp.eq.s32.totalorder %s20, 3
      %p52 = por %p50, %p51
      %p53 = scmp.ne.s32.totalorder %s42, %s43
      %p54 = scmp.eq.s32.totalorder %s20, 0
      %p55 = por %p53, %p54
      %p56 = scmp.ne.s32.totalorder %s42, %s43
      %p57 = scmp.eq.s32.totalorder %s21, 3
      %p58 = por %p56, %p57
      %p60 = scmp.ne.s32.totalorder %s43, %s59
      %p61 = scmp.eq.s32.totalorder %s21, 0
      %p62 = por %p60, %p61
      %s64 = sadd.s32 %s63, 1
      %p67 = scmp.eq.s32.totalorder %s15, 3
      %p68 = scmp.ne.s32.totalorder %s63, %s65
      %p69 = scmp.eq.s32.totalorder %s15, 0
      %p70 = por %p68, %p69
      %p71 = scmp.ne.s32.totalorder %s63, %s65
      %p72 = scmp.eq.s32.totalorder %s20, 3
      %p73 = por %p71, %p72
      %p74 = scmp.ne.s32.totalorder %s65, %s66
      %p75 = scmp.eq.s32.totalorder %s20, 0
      %p76 = por %p74, %p75
      %p77 = scmp.ne.s32.totalorder %s65, %s66
      %p78 = scmp.eq.s32.totalorder %s21, 3
      %p79 = por %p77, %p78
      %p81 = scmp.ne.s32.totalorder %s66, %s80
      %p82 = scmp.eq.s32.totalorder %s21, 0
      %p83 = por %p81, %p82
      %s84 = ssub.s32 %s22, %s34
      %s85 = ssub.s32 %s23, %s30
      %s86 = sor.u32 %s84, %s85
      %p87 = scmp.eq.s32.totalorder %s86, 0
      %s89 = sadd.s32 %s88, 1
      %s90 = scalar_select %p87, %s88, %s89
      %p93 = pneg %p87
      %p94 = scmp.eq.s32.totalorder %s15, 3
      %p95 = por %p93, %p94
      %p96 = scmp.ne.s32.totalorder %s88, %s91
      %p97 = scmp.eq.s32.totalorder %s15, 0
      %p98 = por %p96, %p97
      %p99 = scmp.ne.s32.totalorder %s88, %s91
      %p100 = scmp.eq.s32.totalorder %s20, 3
      %p101 = por %p99, %p100
      %p102 = scmp.ne.s32.totalorder %s91, %s92
      %p103 = scmp.eq.s32.totalorder %s20, 0
      %p104 = por %p102, %p103
      %p105 = scmp.ne.s32.totalorder %s91, %s92
      %p106 = scmp.eq.s32.totalorder %s21, 3
      %p107 = por %p105, %p106
      %p109 = scmp.ne.s32.totalorder %s92, %s108
      %p110 = scmp.eq.s32.totalorder %s21, 0
      %p111 = por %p109, %p110
      %p112 = scmp.le.s32.totalorder 1, %s15
      %p113 = scmp.lt.s32.totalorder %s15, 5
      %p114 = pnand %p112, %p113
      %p115 = pneg %p114
      // Predicated region
      $region9: #{my_dgnn_forward.4} parent=5 // pred_check
        _
      $region10: #{my_dgnn_forward.4} parent=5 // pred_check_branch
        %117 = sbr.rel (%p114) target = $region12
      $region11: #{my_dgnn_forward.4} parent=5 // pred_region
        %s118 = ssub.s32 %s15, 1
        // Predicated region
        $region13: #{my_dgnn_forward.4} parent=11 // pred_check
          %p119 = pneg %p76
        $region14: #{my_dgnn_forward.4} parent=11 // pred_check_branch
          %121 = sbr.rel (%p119) target = $region16
        $region15: #{my_dgnn_forward.4} parent=11 // pred_region
          %s123 = ssub.s32 64, 64
          %124 = vsyncadd [#allocation6], %s123
          %s126 = sshll.u32 [#allocation5], 4
          %s127 = int_to_ptr.vmem [resolvable:$true] %s126
          %129 = dma.hbm_to_vmem [thread:$0]  %s1, 64, %s127, [#allocation6]
        $region16: #{my_dgnn_forward.4} parent=11 // pred_fallthru
          _
      $region12: #{my_dgnn_forward.4} parent=5 // pred_fallthru
        _
      %p130 = scmp.lt.s32.totalorder %s15, 4
      // Predicated region
      $region17: #{my_dgnn_forward.4} parent=5 // pred_check
        %p131 = pneg %p130
      $region18: #{my_dgnn_forward.4} parent=5 // pred_check_branch
        %133 = sbr.rel (%p131) target = $region20
      $region19: #{my_dgnn_forward.4} parent=5 // pred_region
        // Predicated region
        $region21: #{my_dgnn_forward.4} parent=19 // pred_check
          %p134 = pneg %p49
        $region22: #{my_dgnn_forward.4} parent=19 // pred_check_branch
          %136 = sbr.rel (%p134) target = $region24
        $region23: #{my_dgnn_forward.4} parent=19 // pred_region
          %s137 = sand.u32 %s39, 1
          %s138 = scalar_lea.sflag [#allocation3], %s137
          %s139 = sand.u32 %s39, 1
          %s140 = smul.addr %s139, 8
          %s141 = scalar_lea.vmem [#allocation2], %s140
          %s142 = smul.u32 2, %s23
          %s144 = ssub.s32 128, 128
          %145 = vsyncadd %s138, %s144
          %s146 = smul.addr %s22, 2
          %s147 = sadd.s32 %s142, %s146
          %s148 = smul.addr %s147, 64
          %s149 = scalar_lea.hbm %s0, %s148
          %s150 = sshll.u32 %s141, 4
          %s151 = int_to_ptr.vmem [resolvable:$true] %s150
          %156 = dma.hbm_to_vmem [thread:$0]  %s149, 128, %s151, %s138, 64, 64, 4
        $region24: #{my_dgnn_forward.4} parent=19 // pred_fallthru
          _
      $region20: #{my_dgnn_forward.4} parent=5 // pred_fallthru
        _
      %p157 = scmp.le.s32.totalorder 1, %s15
      %p158 = scmp.lt.s32.totalorder %s15, 5
      %p159 = pnand %p157, %p158
      %p160 = pneg %p159
      // Predicated region
      $region25: #{my_dgnn_forward.4} parent=5 // pred_check
        _
      $region26: #{my_dgnn_forward.4} parent=5 // pred_check_branch
        %162 = sbr.rel (%p159) target = $region28
      $region27: #{my_dgnn_forward.4} parent=5 // pred_region
        %s163 = ssub.s32 %s15, 1
        %s164 = sand.u32 %s42, 1
        %s165 = scalar_lea.sflag [#allocation3], %s164
        %s166 = sand.u32 %s42, 1
        %s167 = smul.addr %s166, 8
        %s168 = scalar_lea.vmem [#allocation2], %s167
        // Predicated region
        $region29: #{my_dgnn_forward.4} parent=27 // pred_check
          %p169 = pneg %p55
        $region30: #{my_dgnn_forward.4} parent=27 // pred_check_branch
          %171 = sbr.rel (%p169) target = $region32
        $region31: #{my_dgnn_forward.4} parent=27 // pred_region
          %172 = dma.done %s165, 128
        $region32: #{my_dgnn_forward.4} parent=27 // pred_fallthru
          _
        // Predicated region
        $region33: #{my_dgnn_forward.4} parent=27 // pred_check
          %p173 = pneg %p76
        $region34: #{my_dgnn_forward.4} parent=27 // pred_check_branch
          %175 = sbr.rel (%p173) target = $region36
        $region35: #{my_dgnn_forward.4} parent=27 // pred_region
          %176 = dma.done [#allocation6], 64
        $region36: #{my_dgnn_forward.4} parent=27 // pred_fallthru
          _
        %s177 = sand.u32 %s42, 1
        %s178 = scalar_lea.sflag [#allocation3], %s177
        %s179 = sand.u32 %s42, 1
        %s180 = smul.addr %s179, 8
        %s181 = scalar_lea.vmem [#allocation2], %s180
        %p182 = pneg %p55
        %p183 = pneg %p52
        %p184 = pneg %p76
        %p185 = pneg %p73
        %p186 = pneg %p104
        %p187 = pneg %p101
        %s188 = sand.u32 %s91, 1
        %s189 = scalar_lea.sflag [#allocation4], %s188
        %s190 = sand.u32 %s91, 1
        %s191 = smul.addr %s190, 8
        %s192 = scalar_lea.vmem [#allocation7], %s191
        %s193 = smul.u32 2, %s25
        %s194 = smul.u32 2, %s25
        %v196 = vld [vmem:[%s168] sm:$0xf]
        %v197 = vld [vmem:[%s168 + $0x4] sm:$0xf]
        %v198 = vld [vmem:[#allocation5] sm:$0xf]
        %v201 = vunpack.c.l.b16 %v196
        %v202 = vunpack.c.l.b16 %v197
        %v203 = vpack.c.b16 %v202, %v201
        %vm204 = vcmask 64512
        %v206 = vsel %vm204, %v203, 0
        %vm208 = vcmask 1043456
        %v210 = vsel %vm208, %v198, 0
        %212 = vmatprep.subr.bf16.mxu0 0
        %213 = vmatpush1.bf16.msra.mxu0 %v210
        %214 = vmatprep.subr.bf16.mxu0 0
        %215 = vmatpush1.bf16.msra.mxu0 0
        %216 = vmatprep.subr.bf16.mxu0 0
        %217 = vmatpush1.bf16.msra.mxu0 0
        %218 = vmatprep.subr.bf16.mxu0 0
        %219 = vmatpush1.bf16.msra.mxu0 0
        %220 = vmatprep.subr.bf16.mxu0 0
        %221 = vmatpush1.bf16.msra.mxu0 0
        %222 = vmatprep.subr.bf16.mxu0 0
        %223 = vmatpush1.bf16.msra.mxu0 0
        %224 = vmatprep.subr.bf16.mxu0 0
        %225 = vmatpush1.bf16.msra.mxu0 0
        %226 = vmatprep.subr.bf16.mxu0 0
        %227 = vmatpush1.bf16.msra.mxu0 0
        %228 = vmatprep.subr.bf16.mxu0 0
        %229 = vmatpush1.bf16.msra.mxu0 0
        %230 = vmatprep.subr.bf16.mxu0 0
        %231 = vmatpush1.bf16.msra.mxu0 0
        %232 = vmatprep.subr.bf16.mxu0 0
        %233 = vmatpush1.bf16.msra.mxu0 0
        %234 = vmatprep.subr.bf16.mxu0 0
        %235 = vmatpush1.bf16.msra.mxu0 0
        %236 = vmatprep.subr.bf16.mxu0 0
        %237 = vmatpush1.bf16.msra.mxu0 0
        %238 = vmatprep.subr.bf16.mxu0 0
        %239 = vmatpush1.bf16.msra.mxu0 0
        %240 = vmatprep.subr.bf16.mxu0 0
        %241 = vmatpush1.bf16.msra.mxu0 0
        %242 = vmatprep.subr.bf16.mxu0 0
        %243 = vmatpush1.bf16.msra.mxu0 0
        %244 = vmatprep.mubr.bf16.mxu0 0
        %245 = vmatmul.mubr.bf16.gmra.mrb[0].mxu0 %v206
        %v246 = vpop.f32.mrb[0].mxu0
        %v247 = vadd.f32 0.0, %v246
        %v248 = vpop.f32.mrb[0].mxu0
        %v249 = vpop.f32.mrb[0].mxu0
        %v250 = vadd.f32 0.0, %v249
        %v251 = vpop.f32.mrb[0].mxu0
        %252 = vdwg.mxu0
        %v253 = vpack.c.bf16 %v250, %v247
        %v255 = vunpack.c.l.b16 %v253
        %v256 = vunpack.c.h.b16 %v253
        %v257 = vpack.c.b16 %v255, %v255
        %v258 = vpack.c.b16 %v256, %v256
        %261 = vst [vmem:[%s192] sm:$0xf] %v257
        %262 = vst [vmem:[%s192 + $0x4] sm:$0xf] %v258
        %s263 = sand.u32 %s91, 1
        %s264 = scalar_lea.sflag [#allocation4], %s263
        %s265 = sand.u32 %s91, 1
        %s266 = smul.addr %s265, 8
        %s267 = scalar_lea.vmem [#allocation7], %s266
        // Predicated region
        $region37: #{my_dgnn_forward.4} parent=27 // pred_check
          %p268 = pneg %p101
        $region38: #{my_dgnn_forward.4} parent=27 // pred_check_branch
          %270 = sbr.rel (%p268) target = $region40
        $region39: #{my_dgnn_forward.4} parent=27 // pred_region
          %s271 = smul.u32 2, %s25
          %s273 = ssub.s32 128, 128
          %274 = vsyncadd %s264, %s273
          %s275 = smul.addr %s24, 2
          %s276 = sadd.s32 %s271, %s275
          %s277 = smul.addr %s276, 64
          %s278 = scalar_lea.hbm %s2, %s277
          %s279 = sshll.u32 %s267, 4
          %s280 = int_to_ptr.vmem [resolvable:$true] %s279
          %285 = dma.vmem_to_hbm [thread:$0]  %s280, 128, %s278, %s264, 64, 64, 4
        $region40: #{my_dgnn_forward.4} parent=27 // pred_fallthru
          _
      $region28: #{my_dgnn_forward.4} parent=5 // pred_fallthru
        _
      %p286 = scmp.le.s32.totalorder 2, %s15
      // Predicated region
      $region41: #{my_dgnn_forward.4} parent=5 // pred_check
        %p287 = pneg %p286
      $region42: #{my_dgnn_forward.4} parent=5 // pred_check_branch
        %289 = sbr.rel (%p287) target = $region44
      $region43: #{my_dgnn_forward.4} parent=5 // pred_region
        %s290 = ssub.s32 %s15, 2
        // Predicated region
        $region45: #{my_dgnn_forward.4} parent=43 // pred_check
          %p291 = pneg %p107
        $region46: #{my_dgnn_forward.4} parent=43 // pred_check_branch
          %293 = sbr.rel (%p291) target = $region48
        $region47: #{my_dgnn_forward.4} parent=43 // pred_region
          %s294 = sand.u32 %s92, 1
          %s295 = scalar_lea.sflag [#allocation4], %s294
          %s296 = sand.u32 %s92, 1
          %s297 = smul.addr %s296, 8
          %s298 = scalar_lea.vmem [#allocation7], %s297
          %299 = dma.done %s295, 128
        $region48: #{my_dgnn_forward.4} parent=43 // pred_fallthru
          _
      $region44: #{my_dgnn_forward.4} parent=5 // pred_fallthru
        _
    $region6: #{my_dgnn_forward.4} parent=1 // loop_footer
      %s19 = sadd.s32 1, %s15
    $region7: #{my_dgnn_forward.4} parent=1 // loop_footer_branch
      %14 = sbr.rel target = $region3
    $region8: #{my_dgnn_forward.4} parent=1 // loop_exit
      _
    %300 = vsyncpa [#allocation3], 1
    %s301 = scalar_lea.sflag [#allocation3], 1
    %302 = vsyncpa %s301, 1
    %303 = vsyncpa [#allocation6], 1
    %304 = vsyncpa [#allocation4], 1
    %s305 = scalar_lea.sflag [#allocation4], 1
    %306 = vsyncpa %s305, 1

// kernel: my_dgnn_forward.5
$region0: #{my_dgnn_forward.5}
  #allocation0 [shape = 'u32[]', space=smem, size = 0x4, offset = 0x4, fixed_abs, tag = 'smem constant byte address 0x4 - core index']
  #allocation1 [shape = 'u32[144,128]{1,0:T(1,128)}', space=vmem, size = 0x12000, scoped, tag = 'internal scratch']
  #allocation2 [shape = 'f32[16,128]{1,0:T(8,128)}', space=vmem, size = 0x2000, scoped, tag = 'scratch operand']
  %s0 = inlined_call_operand.hbm [shape: bf16[4,16,16], index: 0, kind: input, shape index: {}]
  %s1 = inlined_call_operand.hbm [shape: bf16[4,16,128], index: 1, kind: input, shape index: {}]
  %s2 = inlined_call_operand.hbm [shape: f32[1,128], index: 2, kind: input, shape index: {}]
  %s3 = inlined_call_operand.hbm [shape: bf16[4,16,128], index: 3, kind: output, shape index: {}]
  %s4 = sld [smem:[#allocation0]]
  $region65: #{my_dgnn_forward.5} parent=0
    _
  %s6 = ssub.s32 1, %s4
  %s7 = scalar_select 0, %s6, %s4
  $region1: #{my_dgnn_forward.5} parent=0
    #allocation3 [shape = 'u8[8192]{0}', space=vmem, size = 0x2000, scoped, tag = 'input window, operand 0']
    #allocation4 [shape = 's32[2]{0}', space=sflag, size = 0x8, scoped, tag = 'scoped memory for my_dgnn_forward.5']
    #allocation5 [shape = 's32[2]{0}', space=sflag, size = 0x8, scoped, tag = 'scoped memory for my_dgnn_forward.5']
    #allocation6 [shape = 'u8[8192]{0}', space=vmem, size = 0x2000, scoped, tag = 'input window, operand 1']
    #allocation7 [shape = 's32[2]{0}', space=sflag, size = 0x8, scoped, tag = 'scoped memory for my_dgnn_forward.5']
    #allocation8 [shape = 'u8[512]{0}', space=vmem, size = 0x400, scoped, tag = 'input window, operand 2, single buffered']
    #allocation9 [shape = 'u8[8192]{0}', space=vmem, size = 0x2000, scoped, tag = 'output window, operand 0']
    %8 = vsyncpa [#allocation4], 0
    %s9 = scalar_lea.sflag [#allocation4], 1
    %10 = vsyncpa %s9, 0
    %11 = vsyncpa [#allocation7], 0
    %s12 = scalar_lea.sflag [#allocation7], 1
    %13 = vsyncpa %s12, 0
    %14 = vsyncpa [#allocation5], 0
    %s15 = scalar_lea.sflag [#allocation5], 1
    %16 = vsyncpa %s15, 0
    loop: start=0, step=1, limit=6
    $region2: #{my_dgnn_forward.5} parent=1 // loop_pre_header
      _
    $region3: #{my_dgnn_forward.5} parent=1 // loop_header
      %s18 = sphi 0, %s22
      %p19 = scmp.ge.s32.totalorder %s18, 6
      %s25 = sphi 0, %s44
      %s26 = sphi 0, %s40
      %s27 = sphi 0, %s36
      %s28 = sphi 0, %s25
      %s29 = sphi 0, %s26
      %s30 = sphi 0, %s27
      %s31 = sphi 0, %s28
      %s32 = sphi 0, %s29
      %s33 = sphi 0, %s30
      %s51 = sphi 0, %s53
      %s54 = sphi 0, %s51
      %s55 = sphi 0, %s54
      %s71 = sphi 0, %s55
      %s79 = sphi 0, %s81
      %s82 = sphi 0, %s79
      %s83 = sphi 0, %s82
      %s99 = sphi 0, %s83
      %s103 = sphi 0, %s103
      %s105 = sphi 0, %s103
      %s106 = sphi 0, %s105
      %s120 = sphi 0, %s106
      %s128 = sphi 0, %s130
      %s131 = sphi 0, %s128
      %s132 = sphi 0, %s131
      %s148 = sphi 0, %s132
    $region4: #{my_dgnn_forward.5} parent=1 // loop_header_branch
      %21 = sbr.rel (%p19) target = $region8
    $region5: #{my_dgnn_forward.5} parent=1 // loop_body
      %s23 = ssub.s32 %s18, 1
      %s24 = ssub.s32 %s18, 2
      %s34 = sadd.s32 1, %s27
      %p35 = scmp.ge.s32.totalorder %s34, 1
      %s36 = scalar_select %p35, 0, %s34
      %s37 = sadd.s32 1, %s26
      %s38 = scalar_select %p35, %s37, %s26
      %p39 = scmp.ge.s32.totalorder %s38, 1
      %s40 = scalar_select %p39, 0, %s38
      %s41 = sadd.s32 1, %s25
      %s42 = scalar_select %p39, %s41, %s25
      %p43 = scmp.ge.s32.totalorder %s42, 4
      %s44 = scalar_select %p43, 0, %s42
      %s45 = ssub.s32 %s25, %s44
      %s46 = ssub.s32 %s26, %s40
      %s47 = sor.u32 %s45, %s46
      %s48 = ssub.s32 %s27, %s36
      %s49 = sor.u32 %s47, %s48
      %p50 = scmp.eq.s32.totalorder %s49, 0
      %s52 = sadd.s32 %s51, 1
      %s53 = scalar_select %p50, %s51, %s52
      %p56 = pneg %p50
      %p57 = scmp.eq.s32.totalorder %s18, 3
      %p58 = por %p56, %p57
      %p59 = scmp.ne.s32.totalorder %s51, %s54
      %p60 = scmp.eq.s32.totalorder %s18, 0
      %p61 = por %p59, %p60
      %p62 = scmp.ne.s32.totalorder %s51, %s54
      %p63 = scmp.eq.s32.totalorder %s23, 3
      %p64 = por %p62, %p63
      %p65 = scmp.ne.s32.totalorder %s54, %s55
      %p66 = scmp.eq.s32.totalorder %s23, 0
      %p67 = por %p65, %p66
      %p68 = scmp.ne.s32.totalorder %s54, %s55
      %p69 = scmp.eq.s32.totalorder %s24, 3
      %p70 = por %p68, %p69
      %p72 = scmp.ne.s32.totalorder %s55, %s71
      %p73 = scmp.eq.s32.totalorder %s24, 0
      %p74 = por %p72, %p73
      %s75 = ssub.s32 %s25, %s44
      %s76 = ssub.s32 %s27, %s36
      %s77 = sor.u32 %s75, %s76
      %p78 = scmp.eq.s32.totalorder %s77, 0
      %s80 = sadd.s32 %s79, 1
      %s81 = scalar_select %p78, %s79, %s80
      %p84 = pneg %p78
      %p85 = scmp.eq.s32.totalorder %s18, 3
      %p86 = por %p84, %p85
      %p87 = scmp.ne.s32.totalorder %s79, %s82
      %p88 = scmp.eq.s32.totalorder %s18, 0
      %p89 = por %p87, %p88
      %p90 = scmp.ne.s32.totalorder %s79, %s82
      %p91 = scmp.eq.s32.totalorder %s23, 3
      %p92 = por %p90, %p91
      %p93 = scmp.ne.s32.totalorder %s82, %s83
      %p94 = scmp.eq.s32.totalorder %s23, 0
      %p95 = por %p93, %p94
      %p96 = scmp.ne.s32.totalorder %s82, %s83
      %p97 = scmp.eq.s32.totalorder %s24, 3
      %p98 = por %p96, %p97
      %p100 = scmp.ne.s32.totalorder %s83, %s99
      %p101 = scmp.eq.s32.totalorder %s24, 0
      %p102 = por %p100, %p101
      %s104 = sadd.s32 %s103, 1
      %p107 = scmp.eq.s32.totalorder %s18, 3
      %p108 = scmp.ne.s32.totalorder %s103, %s105
      %p109 = scmp.eq.s32.totalorder %s18, 0
      %p110 = por %p108, %p109
      %p111 = scmp.ne.s32.totalorder %s103, %s105
      %p112 = scmp.eq.s32.totalorder %s23, 3
      %p113 = por %p111, %p112
      %p114 = scmp.ne.s32.totalorder %s105, %s106
      %p115 = scmp.eq.s32.totalorder %s23, 0
      %p116 = por %p114, %p115
      %p117 = scmp.ne.s32.totalorder %s105, %s106
      %p118 = scmp.eq.s32.totalorder %s24, 3
      %p119 = por %p117, %p118
      %p121 = scmp.ne.s32.totalorder %s106, %s120
      %p122 = scmp.eq.s32.totalorder %s24, 0
      %p123 = por %p121, %p122
      %s124 = ssub.s32 %s25, %s44
      %s125 = ssub.s32 %s26, %s40
      %s126 = sor.u32 %s124, %s125
      %p127 = scmp.eq.s32.totalorder %s126, 0
      %s129 = sadd.s32 %s128, 1
      %s130 = scalar_select %p127, %s128, %s129
      %p133 = pneg %p127
      %p134 = scmp.eq.s32.totalorder %s18, 3
      %p135 = por %p133, %p134
      %p136 = scmp.ne.s32.totalorder %s128, %s131
      %p137 = scmp.eq.s32.totalorder %s18, 0
      %p138 = por %p136, %p137
      %p139 = scmp.ne.s32.totalorder %s128, %s131
      %p140 = scmp.eq.s32.totalorder %s23, 3
      %p141 = por %p139, %p140
      %p142 = scmp.ne.s32.totalorder %s131, %s132
      %p143 = scmp.eq.s32.totalorder %s23, 0
      %p144 = por %p142, %p143
      %p145 = scmp.ne.s32.totalorder %s131, %s132
      %p146 = scmp.eq.s32.totalorder %s24, 3
      %p147 = por %p145, %p146
      %p149 = scmp.ne.s32.totalorder %s132, %s148
      %p150 = scmp.eq.s32.totalorder %s24, 0
      %p151 = por %p149, %p150
      %p152 = scmp.le.s32.totalorder 1, %s18
      %p153 = scmp.lt.s32.totalorder %s18, 5
      %p154 = pnand %p152, %p153
      %p155 = pneg %p154
      // Predicated region
      $region9: #{my_dgnn_forward.5} parent=5 // pred_check
        _
      $region10: #{my_dgnn_forward.5} parent=5 // pred_check_branch
        %157 = sbr.rel (%p154) target = $region12
      $region11: #{my_dgnn_forward.5} parent=5 // pred_region
        %s158 = ssub.s32 %s18, 1
        // Predicated region
        $region13: #{my_dgnn_forward.5} parent=11 // pred_check
          %p159 = pneg %p116
        $region14: #{my_dgnn_forward.5} parent=11 // pred_check_branch
          %161 = sbr.rel (%p159) target = $region16
        $region15: #{my_dgnn_forward.5} parent=11 // pred_region
          %s163 = ssub.s32 16, 16
          %164 = vsyncadd [#allocation7], %s163
          %s166 = sshll.u32 [#allocation8], 4
          %s167 = int_to_ptr.vmem [resolvable:$true] %s166
          %169 = dma.hbm_to_vmem [thread:$0]  %s2, 16, %s167, [#allocation7]
        $region16: #{my_dgnn_forward.5} parent=11 // pred_fallthru
          _
      $region12: #{my_dgnn_forward.5} parent=5 // pred_fallthru
        _
      %p170 = scmp.lt.s32.totalorder %s18, 4
      // Predicated region
      $region17: #{my_dgnn_forward.5} parent=5 // pred_check
        %p171 = pneg %p170
      $region18: #{my_dgnn_forward.5} parent=5 // pred_check_branch
        %173 = sbr.rel (%p171) target = $region20
      $region19: #{my_dgnn_forward.5} parent=5 // pred_region
        // Predicated region
        $region21: #{my_dgnn_forward.5} parent=19 // pred_check
          %p174 = pneg %p61
        $region22: #{my_dgnn_forward.5} parent=19 // pred_check_branch
          %176 = sbr.rel (%p174) target = $region24
        $region23: #{my_dgnn_forward.5} parent=19 // pred_region
          %s177 = sand.u32 %s51, 1
          %s178 = scalar_lea.sflag [#allocation4], %s177
          %s179 = sand.u32 %s51, 1
          %s180 = smul.addr %s179, 8
          %s181 = scalar_lea.vmem [#allocation3], %s180
          %s182 = smul.u32 2, %s26
          %s184 = ssub.s32 128, 128
          %185 = vsyncadd %s178, %s184
          %s186 = sadd.s32 %s27, %s182
          %s187 = smul.addr %s25, 2
          %s188 = sadd.s32 %s186, %s187
          %s189 = smul.addr %s188, 64
          %s190 = scalar_lea.hbm %s0, %s189
          %s191 = sshll.u32 %s181, 4
          %s192 = int_to_ptr.vmem [resolvable:$true] %s191
          %197 = dma.hbm_to_vmem [thread:$0]  %s190, 128, %s192, %s178, 64, 64, 4
        $region24: #{my_dgnn_forward.5} parent=19 // pred_fallthru
          _
        // Predicated region
        $region25: #{my_dgnn_forward.5} parent=19 // pred_check
          %p198 = pneg %p89
        $region26: #{my_dgnn_forward.5} parent=19 // pred_check_branch
          %200 = sbr.rel (%p198) target = $region28
        $region27: #{my_dgnn_forward.5} parent=19 // pred_region
          %s201 = sand.u32 %s18, 1
          %s202 = scalar_lea.sflag [#allocation7], %s201
          %s203 = sand.u32 %s79, 1
          %s204 = smul.addr %s203, 8
          %s205 = scalar_lea.vmem [#allocation6], %s204
          %s206 = smul.u32 2, %s27
          %s208 = ssub.s32 128, 128
          %209 = vsyncadd %s202, %s208
          %s210 = smul.addr %s25, 2
          %s211 = sadd.s32 %s206, %s210
          %s212 = smul.addr %s211, 64
          %s213 = scalar_lea.hbm %s1, %s212
          %s214 = sshll.u32 %s205, 4
          %s215 = int_to_ptr.vmem [resolvable:$true] %s214
          %220 = dma.hbm_to_vmem [thread:$0]  %s213, 128, %s215, %s202, 64, 64, 4
        $region28: #{my_dgnn_forward.5} parent=19 // pred_fallthru
          _
      $region20: #{my_dgnn_forward.5} parent=5 // pred_fallthru
        _
      %p221 = scmp.le.s32.totalorder 1, %s18
      %p222 = scmp.lt.s32.totalorder %s18, 5
      %p223 = pnand %p221, %p222
      %p224 = pneg %p223
      // Predicated region
      $region29: #{my_dgnn_forward.5} parent=5 // pred_check
        _
      $region30: #{my_dgnn_forward.5} parent=5 // pred_check_branch
        %226 = sbr.rel (%p223) target = $region32
      $region31: #{my_dgnn_forward.5} parent=5 // pred_region
        %s227 = ssub.s32 %s18, 1
        %s228 = sand.u32 %s54, 1
        %s229 = scalar_lea.sflag [#allocation4], %s228
        %s230 = sand.u32 %s54, 1
        %s231 = smul.addr %s230, 8
        %s232 = scalar_lea.vmem [#allocation3], %s231
        // Predicated region
        $region33: #{my_dgnn_forward.5} parent=31 // pred_check
          %p233 = pneg %p67
        $region34: #{my_dgnn_forward.5} parent=31 // pred_check_branch
          %235 = sbr.rel (%p233) target = $region36
        $region35: #{my_dgnn_forward.5} parent=31 // pred_region
          %236 = dma.done %s229, 128
        $region36: #{my_dgnn_forward.5} parent=31 // pred_fallthru
          _
        %s237 = sand.u32 %s23, 1
        %s238 = scalar_lea.sflag [#allocation7], %s237
        %s239 = sand.u32 %s82, 1
        %s240 = smul.addr %s239, 8
        %s241 = scalar_lea.vmem [#allocation6], %s240
        // Predicated region
        $region37: #{my_dgnn_forward.5} parent=31 // pred_check
          %p242 = pneg %p95
        $region38: #{my_dgnn_forward.5} parent=31 // pred_check_branch
          %244 = sbr.rel (%p242) target = $region40
        $region39: #{my_dgnn_forward.5} parent=31 // pred_region
          %245 = dma.done %s238, 128
        $region40: #{my_dgnn_forward.5} parent=31 // pred_fallthru
          _
        // Predicated region
        $region41: #{my_dgnn_forward.5} parent=31 // pred_check
          %p246 = pneg %p116
        $region42: #{my_dgnn_forward.5} parent=31 // pred_check_branch
          %248 = sbr.rel (%p246) target = $region44
        $region43: #{my_dgnn_forward.5} parent=31 // pred_region
          %249 = dma.done [#allocation7], 16
        $region44: #{my_dgnn_forward.5} parent=31 // pred_fallthru
          _
        %s250 = sand.u32 %s54, 1
        %s251 = scalar_lea.sflag [#allocation4], %s250
        %s252 = sand.u32 %s54, 1
        %s253 = smul.addr %s252, 8
        %s254 = scalar_lea.vmem [#allocation3], %s253
        %p255 = pneg %p67
        %p256 = pneg %p64
        %s257 = sand.u32 %s23, 1
        %s258 = scalar_lea.sflag [#allocation7], %s257
        %s259 = sand.u32 %s82, 1
        %s260 = smul.addr %s259, 8
        %s261 = scalar_lea.vmem [#allocation6], %s260
        %p262 = pneg %p95
        %p263 = pneg %p92
        %p264 = pneg %p116
        %p265 = pneg %p113
        %p266 = pneg %p144
        %p267 = pneg %p141
        %s268 = sand.u32 %s131, 1
        %s269 = scalar_lea.sflag [#allocation5], %s268
        %s270 = sand.u32 %s131, 1
        %s271 = smul.addr %s270, 8
        %s272 = scalar_lea.vmem [#allocation9], %s271
        %s273 = smul.u32 2, %s29
        %s274 = smul.u32 2, %s30
        %s275 = smul.u32 2, %s29
        %p277 = scmp.eq.s32.totalorder %s30, 0
        // Predicated region
        $region45: #{my_dgnn_forward.5} parent=31 // pred_check
          %p278 = pneg %p277
        $region46: #{my_dgnn_forward.5} parent=31 // pred_check_branch
          %280 = sbr.rel (%p278) target = $region48
        $region47: #{my_dgnn_forward.5} parent=31 // pred_region
          %281 = vst [vmem:[#allocation2] sm:$0xff] 0.0
          %282 = vst [vmem:[#allocation2 + $0x8] sm:$0xff] 0.0
        $region48: #{my_dgnn_forward.5} parent=31 // pred_fallthru
          _
        %v283 = vld [vmem:[#allocation2] sm:$0xff]
        %v284 = vld [vmem:[#allocation2 + $0x8] sm:$0xff]
        %v285 = vld [vmem:[%s232] sm:$0xf]
        %v286 = vld [vmem:[%s232 + $0x4] sm:$0xf]
        %v287 = vld [vmem:[%s241] sm:$0xf]
        %v288 = vld [vmem:[%s241 + $0x4] sm:$0xf]
        %v291 = vunpack.c.l.b16 %v285
        %v292 = vunpack.c.l.b16 %v286
        %v293 = vpack.c.b16 %v292, %v291
        %v296 = vunpack.c.l.b16 %v287
        %v297 = vunpack.c.l.b16 %v288
        %v298 = vpack.c.b16 %v297, %v296
        %vm300 = vcmask 130048
        %v302 = vsel %vm300, %v293, 0
        %304 = vmatprep.subr.bf16.mxu0 0
        %305 = vmatpush1.bf16.msra.mxu0 %v298
        %306 = vmatprep.subr.bf16.mxu0 0
        %307 = vmatpush1.bf16.msra.mxu0 0
        %308 = vmatprep.subr.bf16.mxu0 0
        %309 = vmatpush1.bf16.msra.mxu0 0
        %310 = vmatprep.subr.bf16.mxu0 0
        %311 = vmatpush1.bf16.msra.mxu0 0
        %312 = vmatprep.subr.bf16.mxu0 0
        %313 = vmatpush1.bf16.msra.mxu0 0
        %314 = vmatprep.subr.bf16.mxu0 0
        %315 = vmatpush1.bf16.msra.mxu0 0
        %316 = vmatprep.subr.bf16.mxu0 0
        %317 = vmatpush1.bf16.msra.mxu0 0
        %318 = vmatprep.subr.bf16.mxu0 0
        %319 = vmatpush1.bf16.msra.mxu0 0
        %320 = vmatprep.subr.bf16.mxu0 0
        %321 = vmatpush1.bf16.msra.mxu0 0
        %322 = vmatprep.subr.bf16.mxu0 0
        %323 = vmatpush1.bf16.msra.mxu0 0
        %324 = vmatprep.subr.bf16.mxu0 0
        %325 = vmatpush1.bf16.msra.mxu0 0
        %326 = vmatprep.subr.bf16.mxu0 0
        %327 = vmatpush1.bf16.msra.mxu0 0
        %328 = vmatprep.subr.bf16.mxu0 0
        %329 = vmatpush1.bf16.msra.mxu0 0
        %330 = vmatprep.subr.bf16.mxu0 0
        %331 = vmatpush1.bf16.msra.mxu0 0
        %332 = vmatprep.subr.bf16.mxu0 0
        %333 = vmatpush1.bf16.msra.mxu0 0
        %334 = vmatprep.subr.bf16.mxu0 0
        %335 = vmatpush1.bf16.msra.mxu0 0
        %336 = vmatprep.mubr.bf16.mxu0 0
        %337 = vmatmul.mubr.bf16.gmra.mrb[0].mxu0 %v302
        %v338 = vpop.f32.mrb[0].mxu0
        %v339 = vadd.f32 0.0, %v338
        %v340 = vpop.f32.mrb[0].mxu0
        %v341 = vpop.f32.mrb[0].mxu0
        %v342 = vadd.f32 0.0, %v341
        %v343 = vpop.f32.mrb[0].mxu0
        %344 = vdwg.mxu0
        %v345 = vadd.f32 %v283, %v339
        %v346 = vadd.f32 %v284, %v342
        %347 = vst [vmem:[#allocation2] sm:$0xff] %v345
        %348 = vst [vmem:[#allocation2 + $0x8] sm:$0xff] %v346
        // Predicated region
        $region49: #{my_dgnn_forward.5} parent=31 // pred_check
          %p349 = pneg %p277
        $region50: #{my_dgnn_forward.5} parent=31 // pred_check_branch
          %351 = sbr.rel (%p349) target = $region52
        $region51: #{my_dgnn_forward.5} parent=31 // pred_region
          %v352 = vld [vmem:[#allocation2] sm:$0xff]
          %v353 = vld [vmem:[#allocation2 + $0x8] sm:$0xff]
          %v354 = vld [vmem:[#allocation8] sm:$0x1]
          %v356 = vlaneseq
          %v357 = vshrl.u32 %v356, 7
          %v358 = vsub.s32 0, %v357
          %v359 = vrot.slane %v354, %v358
          %v361 = vadd.f32 %v352, %v359
          %v362 = vadd.f32 %v353, %v359
          %v363 = vmax.f32 %v361, 0.0
          %v364 = vmax.f32 %v362, 0.0
          %v365 = vpack.c.bf16 %v364, %v363
          %v367 = vunpack.c.l.b16 %v365
          %v368 = vunpack.c.h.b16 %v365
          %v369 = vpack.c.b16 %v367, %v367
          %v370 = vpack.c.b16 %v368, %v368
          %373 = vst [vmem:[%s272] sm:$0xf] %v369
          %374 = vst [vmem:[%s272 + $0x4] sm:$0xf] %v370
        $region52: #{my_dgnn_forward.5} parent=31 // pred_fallthru
          _
        %s375 = sand.u32 %s131, 1
        %s376 = scalar_lea.sflag [#allocation5], %s375
        %s377 = sand.u32 %s131, 1
        %s378 = smul.addr %s377, 8
        %s379 = scalar_lea.vmem [#allocation9], %s378
        // Predicated region
        $region53: #{my_dgnn_forward.5} parent=31 // pred_check
          %p380 = pneg %p141
        $region54: #{my_dgnn_forward.5} parent=31 // pred_check_branch
          %382 = sbr.rel (%p380) target = $region56
        $region55: #{my_dgnn_forward.5} parent=31 // pred_region
          %s383 = smul.u32 2, %s29
          %s385 = ssub.s32 128, 128
          %386 = vsyncadd %s376, %s385
          %s387 = smul.addr %s28, 2
          %s388 = sadd.s32 %s383, %s387
          %s389 = smul.addr %s388, 64
          %s390 = scalar_lea.hbm %s3, %s389
          %s391 = sshll.u32 %s379, 4
          %s392 = int_to_ptr.vmem [resolvable:$true] %s391
          %397 = dma.vmem_to_hbm [thread:$0]  %s392, 128, %s390, %s376, 64, 64, 4
        $region56: #{my_dgnn_forward.5} parent=31 // pred_fallthru
          _
      $region32: #{my_dgnn_forward.5} parent=5 // pred_fallthru
        _
      %p398 = scmp.le.s32.totalorder 2, %s18
      // Predicated region
      $region57: #{my_dgnn_forward.5} parent=5 // pred_check
        %p399 = pneg %p398
      $region58: #{my_dgnn_forward.5} parent=5 // pred_check_branch
        %401 = sbr.rel (%p399) target = $region60
      $region59: #{my_dgnn_forward.5} parent=5 // pred_region
        %s402 = ssub.s32 %s18, 2
        // Predicated region
        $region61: #{my_dgnn_forward.5} parent=59 // pred_check
          %p403 = pneg %p147
        $region62: #{my_dgnn_forward.5} parent=59 // pred_check_branch
          %405 = sbr.rel (%p403) target = $region64
        $region63: #{my_dgnn_forward.5} parent=59 // pred_region
          %s406 = sand.u32 %s132, 1
          %s407 = scalar_lea.sflag [#allocation5], %s406
          %s408 = sand.u32 %s132, 1
          %s409 = smul.addr %s408, 8
          %s410 = scalar_lea.vmem [#allocation9], %s409
          %411 = dma.done %s407, 128
        $region64: #{my_dgnn_forward.5} parent=59 // pred_fallthru
          _
      $region60: #{my_dgnn_forward.5} parent=5 // pred_fallthru
        _
    $region6: #{my_dgnn_forward.5} parent=1 // loop_footer
      %s22 = sadd.s32 1, %s18
    $region7: #{my_dgnn_forward.5} parent=1 // loop_footer_branch
      %17 = sbr.rel target = $region3
    $region8: #{my_dgnn_forward.5} parent=1 // loop_exit
      _
    %412 = vsyncpa [#allocation4], 1
    %s413 = scalar_lea.sflag [#allocation4], 1
    %414 = vsyncpa %s413, 1
    %415 = vsyncpa [#allocation7], 1
    %s416 = scalar_lea.sflag [#allocation7], 1
    %417 = vsyncpa %s416, 1
    %418 = vsyncpa [#allocation5], 1
    %s419 = scalar_lea.sflag [#allocation5], 1
    %420 = vsyncpa %s419, 1

// kernel: my_dgnn_forward.6
$region0: #{my_dgnn_forward.6}
  #allocation0 [shape = 'u32[]', space=smem, size = 0x4, offset = 0x4, fixed_abs, tag = 'smem constant byte address 0x4 - core index']
  #allocation1 [shape = 'u32[144,128]{1,0:T(1,128)}', space=vmem, size = 0x12000, scoped, tag = 'internal scratch']
  %s0 = inlined_call_operand.hbm [shape: bf16[4,16,128], index: 0, kind: input, shape index: {}]
  %s1 = inlined_call_operand.hbm [shape: bf16[128,128], index: 1, kind: input, shape index: {}]
  %s2 = inlined_call_operand.hbm [shape: bf16[128,128], index: 2, kind: input, shape index: {}]
  %s3 = inlined_call_operand.hbm [shape: bf16[128,128], index: 3, kind: input, shape index: {}]
  %s4 = inlined_call_operand.hbm [shape: f32[16,128], index: 4, kind: output, shape index: {}]
  %s5 = sld [smem:[#allocation0]]
  $region42: #{my_dgnn_forward.6} parent=0
    _
  %s7 = ssub.s32 1, %s5
  %s8 = scalar_select 0, %s7, %s5
  $region1: #{my_dgnn_forward.6} parent=0
    #allocation2 [shape = 'u8[16384]{0}', space=vmem, size = 0x4000, scoped, tag = 'input window, operand 0, single buffered']
    #allocation3 [shape = 's32[1]{0}', space=sflag, size = 0x4, scoped, tag = 'scoped memory for my_dgnn_forward.6']
    #allocation4 [shape = 's32[1]{0}', space=sflag, size = 0x4, scoped, tag = 'scoped memory for my_dgnn_forward.6']
    #allocation5 [shape = 'u8[32768]{0}', space=vmem, size = 0x8000, scoped, tag = 'input window, operand 1, single buffered']
    #allocation6 [shape = 's32[1]{0}', space=sflag, size = 0x4, scoped, tag = 'scoped memory for my_dgnn_forward.6']
    #allocation7 [shape = 'u8[32768]{0}', space=vmem, size = 0x8000, scoped, tag = 'input window, operand 2, single buffered']
    #allocation8 [shape = 'u8[32768]{0}', space=vmem, size = 0x8000, scoped, tag = 'input window, operand 3, single buffered']
    #allocation9 [shape = 's32[1]{0}', space=sflag, size = 0x4, scoped, tag = 'scoped memory for my_dgnn_forward.6']
    #allocation10 [shape = 'u8[8192]{0}', space=vmem, size = 0x2000, scoped, tag = 'output window, operand 0, single buffered']
    %9 = vsyncpa [#allocation3], 0
    %10 = vsyncpa [#allocation6], 0
    %11 = vsyncpa [#allocation9], 0
    %12 = vsyncpa [#allocation4], 0
    // Predicated region
    $region2: #{my_dgnn_forward.6} parent=1 // pred_check
      _
    $region3: #{my_dgnn_forward.6} parent=1 // pred_check_branch
      %14 = sbr.rel (0) target = $region5
    $region4: #{my_dgnn_forward.6} parent=1 // pred_region
      %s16 = ssub.s32 512, 512
      %17 = vsyncadd [#allocation3], %s16
      %s18 = sshll.u32 [#allocation2], 4
      %s19 = int_to_ptr.vmem [resolvable:$true] %s18
      %24 = dma.hbm_to_vmem [thread:$0]  %s0, 512, %s19, [#allocation3], 64, 64, 4
    $region5: #{my_dgnn_forward.6} parent=1 // pred_fallthru
      _
    // Predicated region
    $region6: #{my_dgnn_forward.6} parent=1 // pred_check
      _
    $region7: #{my_dgnn_forward.6} parent=1 // pred_check_branch
      %26 = sbr.rel (0) target = $region9
    $region8: #{my_dgnn_forward.6} parent=1 // pred_region
      %s28 = ssub.s32 1024, 1024
      %29 = vsyncadd [#allocation6], %s28
      %s30 = sshll.u32 [#allocation5], 4
      %s31 = int_to_ptr.vmem [resolvable:$true] %s30
      %36 = dma.hbm_to_vmem [thread:$0]  %s1, 1024, %s31, [#allocation6], 64, 64, 4
    $region9: #{my_dgnn_forward.6} parent=1 // pred_fallthru
      _
    // Predicated region
    $region10: #{my_dgnn_forward.6} parent=1 // pred_check
      _
    $region11: #{my_dgnn_forward.6} parent=1 // pred_check_branch
      %38 = sbr.rel (0) target = $region13
    $region12: #{my_dgnn_forward.6} parent=1 // pred_region
      %s40 = ssub.s32 1024, 1024
      %41 = vsyncadd [#allocation6], %s40
      %s42 = sshll.u32 [#allocation7], 4
      %s43 = int_to_ptr.vmem [resolvable:$true] %s42
      %48 = dma.hbm_to_vmem [thread:$0]  %s2, 1024, %s43, [#allocation6], 64, 64, 4
    $region13: #{my_dgnn_forward.6} parent=1 // pred_fallthru
      _
    // Predicated region
    $region14: #{my_dgnn_forward.6} parent=1 // pred_check
      _
    $region15: #{my_dgnn_forward.6} parent=1 // pred_check_branch
      %50 = sbr.rel (0) target = $region17
    $region16: #{my_dgnn_forward.6} parent=1 // pred_region
      %s52 = ssub.s32 1024, 1024
      %53 = vsyncadd [#allocation9], %s52
      %s54 = sshll.u32 [#allocation8], 4
      %s55 = int_to_ptr.vmem [resolvable:$true] %s54
      %60 = dma.hbm_to_vmem [thread:$0]  %s3, 1024, %s55, [#allocation9], 64, 64, 4
    $region17: #{my_dgnn_forward.6} parent=1 // pred_fallthru
      _
    // Predicated region
    $region18: #{my_dgnn_forward.6} parent=1 // pred_check
      _
    $region19: #{my_dgnn_forward.6} parent=1 // pred_check_branch
      %62 = sbr.rel (0) target = $region21
    $region20: #{my_dgnn_forward.6} parent=1 // pred_region
      %63 = dma.done [#allocation3], 512
    $region21: #{my_dgnn_forward.6} parent=1 // pred_fallthru
      _
    // Predicated region
    $region22: #{my_dgnn_forward.6} parent=1 // pred_check
      _
    $region23: #{my_dgnn_forward.6} parent=1 // pred_check_branch
      %65 = sbr.rel (0) target = $region25
    $region24: #{my_dgnn_forward.6} parent=1 // pred_region
      %66 = dma.done [#allocation6], 1024
    $region25: #{my_dgnn_forward.6} parent=1 // pred_fallthru
      _
    // Predicated region
    $region26: #{my_dgnn_forward.6} parent=1 // pred_check
      _
    $region27: #{my_dgnn_forward.6} parent=1 // pred_check_branch
      %68 = sbr.rel (0) target = $region29
    $region28: #{my_dgnn_forward.6} parent=1 // pred_region
      %69 = dma.done [#allocation6], 1024
    $region29: #{my_dgnn_forward.6} parent=1 // pred_fallthru
      _
    // Predicated region
    $region30: #{my_dgnn_forward.6} parent=1 // pred_check
      _
    $region31: #{my_dgnn_forward.6} parent=1 // pred_check_branch
      %71 = sbr.rel (0) target = $region33
    $region32: #{my_dgnn_forward.6} parent=1 // pred_region
      %72 = dma.done [#allocation9], 1024
    $region33: #{my_dgnn_forward.6} parent=1 // pred_fallthru
      _
    %v74 = vld [vmem:[#allocation7] sm:$0xf]
    %v75 = vld [vmem:[#allocation7 + $0x4] sm:$0xf]
    %v76 = vld [vmem:[#allocation7 + $0x8] sm:$0xf]
    %v77 = vld [vmem:[#allocation7 + $0xc] sm:$0xf]
    %v78 = vld [vmem:[#allocation7 + $0x10] sm:$0xf]
    %v79 = vld [vmem:[#allocation7 + $0x14] sm:$0xf]
    %v80 = vld [vmem:[#allocation7 + $0x18] sm:$0xf]
    %v81 = vld [vmem:[#allocation7 + $0x1c] sm:$0xf]
    %v82 = vld [vmem:[#allocation7 + $0x20] sm:$0xf]
    %v83 = vld [vmem:[#allocation7 + $0x24] sm:$0xf]
    %v84 = vld [vmem:[#allocation7 + $0x28] sm:$0xf]
    %v85 = vld [vmem:[#allocation7 + $0x2c] sm:$0xf]
    %v86 = vld [vmem:[#allocation7 + $0x30] sm:$0xf]
    %v87 = vld [vmem:[#allocation7 + $0x34] sm:$0xf]
    %v88 = vld [vmem:[#allocation7 + $0x38] sm:$0xf]
    %v89 = vld [vmem:[#allocation7 + $0x3c] sm:$0xf]
    %v90 = vld [vmem:[#allocation8] sm:$0xf]
    %v91 = vld [vmem:[#allocation8 + $0x4] sm:$0xf]
    %v92 = vld [vmem:[#allocation8 + $0x8] sm:$0xf]
    %v93 = vld [vmem:[#allocation8 + $0xc] sm:$0xf]
    %v94 = vld [vmem:[#allocation8 + $0x10] sm:$0xf]
    %v95 = vld [vmem:[#allocation8 + $0x14] sm:$0xf]
    %v96 = vld [vmem:[#allocation8 + $0x18] sm:$0xf]
    %v97 = vld [vmem:[#allocation8 + $0x1c] sm:$0xf]
    %v98 = vld [vmem:[#allocation8 + $0x20] sm:$0xf]
    %v99 = vld [vmem:[#allocation8 + $0x24] sm:$0xf]
    %v100 = vld [vmem:[#allocation8 + $0x28] sm:$0xf]
    %v101 = vld [vmem:[#allocation8 + $0x2c] sm:$0xf]
    %v102 = vld [vmem:[#allocation8 + $0x30] sm:$0xf]
    %v103 = vld [vmem:[#allocation8 + $0x34] sm:$0xf]
    %v104 = vld [vmem:[#allocation8 + $0x38] sm:$0xf]
    %v105 = vld [vmem:[#allocation8 + $0x3c] sm:$0xf]
    %s106 = scalar_lea.vmem [#allocation2], 24
    %v107 = vld [vmem:[%s106] sm:$0xf]
    %v108 = vld [vmem:[%s106 + $0x4] sm:$0xf]
    %v109 = vld [vmem:[#allocation5] sm:$0xf]
    %v110 = vld [vmem:[#allocation5 + $0x4] sm:$0xf]
    %v111 = vld [vmem:[#allocation5 + $0x8] sm:$0xf]
    %v112 = vld [vmem:[#allocation5 + $0xc] sm:$0xf]
    %v113 = vld [vmem:[#allocation5 + $0x10] sm:$0xf]
    %v114 = vld [vmem:[#allocation5 + $0x14] sm:$0xf]
    %v115 = vld [vmem:[#allocation5 + $0x18] sm:$0xf]
    %v116 = vld [vmem:[#allocation5 + $0x1c] sm:$0xf]
    %v117 = vld [vmem:[#allocation5 + $0x20] sm:$0xf]
    %v118 = vld [vmem:[#allocation5 + $0x24] sm:$0xf]
    %v119 = vld [vmem:[#allocation5 + $0x28] sm:$0xf]
    %v120 = vld [vmem:[#allocation5 + $0x2c] sm:$0xf]
    %v121 = vld [vmem:[#allocation5 + $0x30] sm:$0xf]
    %v122 = vld [vmem:[#allocation5 + $0x34] sm:$0xf]
    %v123 = vld [vmem:[#allocation5 + $0x38] sm:$0xf]
    %v124 = vld [vmem:[#allocation5 + $0x3c] sm:$0xf]
    %v127 = vunpack.c.l.b16 %v107
    %v128 = vunpack.c.l.b16 %v108
    %v129 = vpack.c.b16 %v128, %v127
    %v147 = vunpack.c.l.b16 %v109
    %v148 = vunpack.c.l.b16 %v110
    %v149 = vunpack.c.l.b16 %v111
    %v150 = vunpack.c.l.b16 %v112
    %v151 = vunpack.c.l.b16 %v113
    %v152 = vunpack.c.l.b16 %v114
    %v153 = vunpack.c.l.b16 %v115
    %v154 = vunpack.c.l.b16 %v116
    %v155 = vunpack.c.l.b16 %v117
    %v156 = vunpack.c.l.b16 %v118
    %v157 = vunpack.c.l.b16 %v119
    %v158 = vunpack.c.l.b16 %v120
    %v159 = vunpack.c.l.b16 %v121
    %v160 = vunpack.c.l.b16 %v122
    %v161 = vunpack.c.l.b16 %v123
    %v162 = vunpack.c.l.b16 %v124
    %v163 = vpack.c.b16 %v148, %v147
    %v164 = vpack.c.b16 %v150, %v149
    %v165 = vpack.c.b16 %v152, %v151
    %v166 = vpack.c.b16 %v154, %v153
    %v167 = vpack.c.b16 %v156, %v155
    %v168 = vpack.c.b16 %v158, %v157
    %v169 = vpack.c.b16 %v160, %v159
    %v170 = vpack.c.b16 %v162, %v161
    %179 = vmatprep.subr.bf16.mxu0 0
    %180 = vmatpush1.bf16.msra.mxu0 %v163
    %181 = vmatprep.subr.bf16.mxu0 0
    %182 = vmatpush1.bf16.msra.mxu0 %v164
    %183 = vmatprep.subr.bf16.mxu0 0
    %184 = vmatpush1.bf16.msra.mxu0 %v165
    %185 = vmatprep.subr.bf16.mxu0 0
    %186 = vmatpush1.bf16.msra.mxu0 %v166
    %187 = vmatprep.subr.bf16.mxu0 0
    %188 = vmatpush1.bf16.msra.mxu0 %v167
    %189 = vmatprep.subr.bf16.mxu0 0
    %190 = vmatpush1.bf16.msra.mxu0 %v168
    %191 = vmatprep.subr.bf16.mxu0 0
    %192 = vmatpush1.bf16.msra.mxu0 %v169
    %193 = vmatprep.subr.bf16.mxu0 0
    %194 = vmatpush1.bf16.msra.mxu0 %v170
    %195 = vmatprep.subr.bf16.mxu0 0
    %196 = vmatpush1.bf16.msra.mxu0 0
    %197 = vmatprep.subr.bf16.mxu0 0
    %198 = vmatpush1.bf16.msra.mxu0 0
    %199 = vmatprep.subr.bf16.mxu0 0
    %200 = vmatpush1.bf16.msra.mxu0 0
    %201 = vmatprep.subr.bf16.mxu0 0
    %202 = vmatpush1.bf16.msra.mxu0 0
    %203 = vmatprep.subr.bf16.mxu0 0
    %204 = vmatpush1.bf16.msra.mxu0 0
    %205 = vmatprep.subr.bf16.mxu0 0
    %206 = vmatpush1.bf16.msra.mxu0 0
    %207 = vmatprep.subr.bf16.mxu0 0
    %208 = vmatpush1.bf16.msra.mxu0 0
    %209 = vmatprep.subr.bf16.mxu0 0
    %210 = vmatpush1.bf16.msra.mxu0 0
    %211 = vmatprep.mubr.bf16.mxu0 0
    %212 = vmatmul.mubr.bf16.gmra.mrb[0].mxu0 %v129
    %v213 = vpop.f32.mrb[0].mxu0
    %v214 = vadd.f32 0.0, %v213
    %v215 = vpop.f32.mrb[0].mxu0
    %v216 = vpop.f32.mrb[0].mxu0
    %v217 = vadd.f32 0.0, %v216
    %v218 = vpop.f32.mrb[0].mxu0
    %219 = vdwg.mxu0
    %v220 = vld [vmem:[#allocation2] sm:$0xf]
    %v221 = vld [vmem:[#allocation2 + $0x4] sm:$0xf]
    %v224 = vunpack.c.l.b16 %v220
    %v225 = vunpack.c.l.b16 %v221
    %v226 = vpack.c.b16 %v225, %v224
    %v244 = vunpack.c.l.b16 %v74
    %v245 = vunpack.c.l.b16 %v75
    %v246 = vunpack.c.l.b16 %v76
    %v247 = vunpack.c.l.b16 %v77
    %v248 = vunpack.c.l.b16 %v78
    %v249 = vunpack.c.l.b16 %v79
    %v250 = vunpack.c.l.b16 %v80
    %v251 = vunpack.c.l.b16 %v81
    %v252 = vunpack.c.l.b16 %v82
    %v253 = vunpack.c.l.b16 %v83
    %v254 = vunpack.c.l.b16 %v84
    %v255 = vunpack.c.l.b16 %v85
    %v256 = vunpack.c.l.b16 %v86
    %v257 = vunpack.c.l.b16 %v87
    %v258 = vunpack.c.l.b16 %v88
    %v259 = vunpack.c.l.b16 %v89
    %v260 = vpack.c.b16 %v245, %v244
    %v261 = vpack.c.b16 %v247, %v246
    %v262 = vpack.c.b16 %v249, %v248
    %v263 = vpack.c.b16 %v251, %v250
    %v264 = vpack.c.b16 %v253, %v252
    %v265 = vpack.c.b16 %v255, %v254
    %v266 = vpack.c.b16 %v257, %v256
    %v267 = vpack.c.b16 %v259, %v258
    %276 = vmatprep.subr.bf16.mxu0 0
    %277 = vmatpush1.bf16.msra.mxu0 %v260
    %278 = vmatprep.subr.bf16.mxu0 0
    %279 = vmatpush1.bf16.msra.mxu0 %v261
    %280 = vmatprep.subr.bf16.mxu0 0
    %281 = vmatpush1.bf16.msra.mxu0 %v262
    %282 = vmatprep.subr.bf16.mxu0 0
    %283 = vmatpush1.bf16.msra.mxu0 %v263
    %284 = vmatprep.subr.bf16.mxu0 0
    %285 = vmatpush1.bf16.msra.mxu0 %v264
    %286 = vmatprep.subr.bf16.mxu0 0
    %287 = vmatpush1.bf16.msra.mxu0 %v265
    %288 = vmatprep.subr.bf16.mxu0 0
    %289 = vmatpush1.bf16.msra.mxu0 %v266
    %290 = vmatprep.subr.bf16.mxu0 0
    %291 = vmatpush1.bf16.msra.mxu0 %v267
    %292 = vmatprep.subr.bf16.mxu0 0
    %293 = vmatpush1.bf16.msra.mxu0 0
    %294 = vmatprep.subr.bf16.mxu0 0
    %295 = vmatpush1.bf16.msra.mxu0 0
    %296 = vmatprep.subr.bf16.mxu0 0
    %297 = vmatpush1.bf16.msra.mxu0 0
    %298 = vmatprep.subr.bf16.mxu0 0
    %299 = vmatpush1.bf16.msra.mxu0 0
    %300 = vmatprep.subr.bf16.mxu0 0
    %301 = vmatpush1.bf16.msra.mxu0 0
    %302 = vmatprep.subr.bf16.mxu0 0
    %303 = vmatpush1.bf16.msra.mxu0 0
    %304 = vmatprep.subr.bf16.mxu0 0
    %305 = vmatpush1.bf16.msra.mxu0 0
    %306 = vmatprep.subr.bf16.mxu0 0
    %307 = vmatpush1.bf16.msra.mxu0 0
    %308 = vmatprep.mubr.bf16.mxu0 0
    %309 = vmatmul.mubr.bf16.gmra.mrb[0].mxu0 %v226
    %v310 = vpop.f32.mrb[0].mxu0
    %v311 = vadd.f32 0.0, %v310
    %v312 = vpop.f32.mrb[0].mxu0
    %v313 = vpop.f32.mrb[0].mxu0
    %v314 = vadd.f32 0.0, %v313
    %v315 = vpop.f32.mrb[0].mxu0
    %316 = vdwg.mxu0
    %v333 = vunpack.c.l.b16 %v90
    %v334 = vunpack.c.l.b16 %v91
    %v335 = vunpack.c.l.b16 %v92
    %v336 = vunpack.c.l.b16 %v93
    %v337 = vunpack.c.l.b16 %v94
    %v338 = vunpack.c.l.b16 %v95
    %v339 = vunpack.c.l.b16 %v96
    %v340 = vunpack.c.l.b16 %v97
    %v341 = vunpack.c.l.b16 %v98
    %v342 = vunpack.c.l.b16 %v99
    %v343 = vunpack.c.l.b16 %v100
    %v344 = vunpack.c.l.b16 %v101
    %v345 = vunpack.c.l.b16 %v102
    %v346 = vunpack.c.l.b16 %v103
    %v347 = vunpack.c.l.b16 %v104
    %v348 = vunpack.c.l.b16 %v105
    %v349 = vpack.c.b16 %v334, %v333
    %v350 = vpack.c.b16 %v336, %v335
    %v351 = vpack.c.b16 %v338, %v337
    %v352 = vpack.c.b16 %v340, %v339
    %v353 = vpack.c.b16 %v342, %v341
    %v354 = vpack.c.b16 %v344, %v343
    %v355 = vpack.c.b16 %v346, %v345
    %v356 = vpack.c.b16 %v348, %v347
    %365 = vmatprep.subr.bf16.mxu0 0
    %366 = vmatpush1.bf16.msra.mxu0 %v349
    %367 = vmatprep.subr.bf16.mxu0 0
    %368 = vmatpush1.bf16.msra.mxu0 %v350
    %369 = vmatprep.subr.bf16.mxu0 0
    %370 = vmatpush1.bf16.msra.mxu0 %v351
    %371 = vmatprep.subr.bf16.mxu0 0
    %372 = vmatpush1.bf16.msra.mxu0 %v352
    %373 = vmatprep.subr.bf16.mxu0 0
    %374 = vmatpush1.bf16.msra.mxu0 %v353
    %375 = vmatprep.subr.bf16.mxu0 0
    %376 = vmatpush1.bf16.msra.mxu0 %v354
    %377 = vmatprep.subr.bf16.mxu0 0
    %378 = vmatpush1.bf16.msra.mxu0 %v355
    %379 = vmatprep.subr.bf16.mxu0 0
    %380 = vmatpush1.bf16.msra.mxu0 %v356
    %381 = vmatprep.subr.bf16.mxu0 0
    %382 = vmatpush1.bf16.msra.mxu0 0
    %383 = vmatprep.subr.bf16.mxu0 0
    %384 = vmatpush1.bf16.msra.mxu0 0
    %385 = vmatprep.subr.bf16.mxu0 0
    %386 = vmatpush1.bf16.msra.mxu0 0
    %387 = vmatprep.subr.bf16.mxu0 0
    %388 = vmatpush1.bf16.msra.mxu0 0
    %389 = vmatprep.subr.bf16.mxu0 0
    %390 = vmatpush1.bf16.msra.mxu0 0
    %391 = vmatprep.subr.bf16.mxu0 0
    %392 = vmatpush1.bf16.msra.mxu0 0
    %393 = vmatprep.subr.bf16.mxu0 0
    %394 = vmatpush1.bf16.msra.mxu0 0
    %395 = vmatprep.subr.bf16.mxu0 0
    %396 = vmatpush1.bf16.msra.mxu0 0
    %397 = vmatprep.mubr.bf16.mxu0 0
    %398 = vmatmul.mubr.bf16.gmra.mrb[0].mxu0 %v226
    %v399 = vpop.f32.mrb[0].mxu0
    %v400 = vadd.f32 0.0, %v399
    %v401 = vpop.f32.mrb[0].mxu0
    %v402 = vpop.f32.mrb[0].mxu0
    %v403 = vadd.f32 0.0, %v402
    %v404 = vpop.f32.mrb[0].mxu0
    %405 = vdwg.mxu0
    %v406 = vmul.f32 %v311, %v214
    %v407 = vmul.f32 %v314, %v217
    %408 = vadd.xlane.f32.xlu0 %v406
    %v409 = vpop.xlane.xlu0 %408
    %410 = vadd.xlane.f32.xlu0 %v407
    %v411 = vpop.xlane.xlu0 %410
    %v412 = vmul.f32 %v409, 0.17677669
    %v413 = vmul.f32 %v411, 0.17677669
    %v414 = vsub.f32 -inf, %v412
    %v415 = vsub.f32 -inf, %v413
    %v416 = vmul.f32 %v414, 1.442695
    %v417 = vpow.pop %v416
    %v418 = vmul.f32 %v415, 1.442695
    %v419 = vpow.pop %v418
    %v420 = vsub.f32 %v412, %v412
    %v421 = vsub.f32 %v413, %v413
    %v422 = vmul.f32 %v420, 1.442695
    %v423 = vpow.pop %v422
    %v424 = vmul.f32 %v421, 1.442695
    %v425 = vpow.pop %v424
    %v426 = vmul.f32 %v417, 0.0
    %v427 = vmul.f32 %v419, 0.0
    %v428 = vadd.f32 %v426, %v423
    %v429 = vadd.f32 %v427, %v425
    %v430 = vmul.f32 %v423, %v400
    %v431 = vmul.f32 %v425, %v403
    %v432 = vadd.f32 %v426, %v430
    %v433 = vadd.f32 %v427, %v431
    %s434 = scalar_lea.vmem [#allocation2], 8
    %v435 = vld [vmem:[%s434] sm:$0xf]
    %v436 = vld [vmem:[%s434 + $0x4] sm:$0xf]
    %v439 = vunpack.c.l.b16 %v435
    %v440 = vunpack.c.l.b16 %v436
    %v441 = vpack.c.b16 %v440, %v439
    %443 = vmatprep.subr.bf16.mxu0 0
    %444 = vmatpush1.bf16.msra.mxu0 %v260
    %445 = vmatprep.subr.bf16.mxu0 0
    %446 = vmatpush1.bf16.msra.mxu0 %v261
    %447 = vmatprep.subr.bf16.mxu0 0
    %448 = vmatpush1.bf16.msra.mxu0 %v262
    %449 = vmatprep.subr.bf16.mxu0 0
    %450 = vmatpush1.bf16.msra.mxu0 %v263
    %451 = vmatprep.subr.bf16.mxu0 0
    %452 = vmatpush1.bf16.msra.mxu0 %v264
    %453 = vmatprep.subr.bf16.mxu0 0
    %454 = vmatpush1.bf16.msra.mxu0 %v265
    %455 = vmatprep.subr.bf16.mxu0 0
    %456 = vmatpush1.bf16.msra.mxu0 %v266
    %457 = vmatprep.subr.bf16.mxu0 0
    %458 = vmatpush1.bf16.msra.mxu0 %v267
    %459 = vmatprep.subr.bf16.mxu0 0
    %460 = vmatpush1.bf16.msra.mxu0 0
    %461 = vmatprep.subr.bf16.mxu0 0
    %462 = vmatpush1.bf16.msra.mxu0 0
    %463 = vmatprep.subr.bf16.mxu0 0
    %464 = vmatpush1.bf16.msra.mxu0 0
    %465 = vmatprep.subr.bf16.mxu0 0
    %466 = vmatpush1.bf16.msra.mxu0 0
    %467 = vmatprep.subr.bf16.mxu0 0
    %468 = vmatpush1.bf16.msra.mxu0 0
    %469 = vmatprep.subr.bf16.mxu0 0
    %470 = vmatpush1.bf16.msra.mxu0 0
    %471 = vmatprep.subr.bf16.mxu0 0
    %472 = vmatpush1.bf16.msra.mxu0 0
    %473 = vmatprep.subr.bf16.mxu0 0
    %474 = vmatpush1.bf16.msra.mxu0 0
    %475 = vmatprep.mubr.bf16.mxu0 0
    %476 = vmatmul.mubr.bf16.gmra.mrb[0].mxu0 %v441
    %v477 = vpop.f32.mrb[0].mxu0
    %v478 = vadd.f32 0.0, %v477
    %v479 = vpop.f32.mrb[0].mxu0
    %v480 = vpop.f32.mrb[0].mxu0
    %v481 = vadd.f32 0.0, %v480
    %v482 = vpop.f32.mrb[0].mxu0
    %483 = vdwg.mxu0
    %484 = vmatprep.subr.bf16.mxu0 0
    %485 = vmatpush1.bf16.msra.mxu0 %v349
    %486 = vmatprep.subr.bf16.mxu0 0
    %487 = vmatpush1.bf16.msra.mxu0 %v350
    %488 = vmatprep.subr.bf16.mxu0 0
    %489 = vmatpush1.bf16.msra.mxu0 %v351
    %490 = vmatprep.subr.bf16.mxu0 0
    %491 = vmatpush1.bf16.msra.mxu0 %v352
    %492 = vmatprep.subr.bf16.mxu0 0
    %493 = vmatpush1.bf16.msra.mxu0 %v353
    %494 = vmatprep.subr.bf16.mxu0 0
    %495 = vmatpush1.bf16.msra.mxu0 %v354
    %496 = vmatprep.subr.bf16.mxu0 0
    %497 = vmatpush1.bf16.msra.mxu0 %v355
    %498 = vmatprep.subr.bf16.mxu0 0
    %499 = vmatpush1.bf16.msra.mxu0 %v356
    %500 = vmatprep.subr.bf16.mxu0 0
    %501 = vmatpush1.bf16.msra.mxu0 0
    %502 = vmatprep.subr.bf16.mxu0 0
    %503 = vmatpush1.bf16.msra.mxu0 0
    %504 = vmatprep.subr.bf16.mxu0 0
    %505 = vmatpush1.bf16.msra.mxu0 0
    %506 = vmatprep.subr.bf16.mxu0 0
    %507 = vmatpush1.bf16.msra.mxu0 0
    %508 = vmatprep.subr.bf16.mxu0 0
    %509 = vmatpush1.bf16.msra.mxu0 0
    %510 = vmatprep.subr.bf16.mxu0 0
    %511 = vmatpush1.bf16.msra.mxu0 0
    %512 = vmatprep.subr.bf16.mxu0 0
    %513 = vmatpush1.bf16.msra.mxu0 0
    %514 = vmatprep.subr.bf16.mxu0 0
    %515 = vmatpush1.bf16.msra.mxu0 0
    %516 = vmatprep.mubr.bf16.mxu0 0
    %517 = vmatmul.mubr.bf16.gmra.mrb[0].mxu0 %v441
    %v518 = vpop.f32.mrb[0].mxu0
    %v519 = vadd.f32 0.0, %v518
    %v520 = vpop.f32.mrb[0].mxu0
    %v521 = vpop.f32.mrb[0].mxu0
    %v522 = vadd.f32 0.0, %v521
    %v523 = vpop.f32.mrb[0].mxu0
    %524 = vdwg.mxu0
    %v525 = vmul.f32 %v478, %v214
    %v526 = vmul.f32 %v481, %v217
    %527 = vadd.xlane.f32.xlu0 %v525
    %v528 = vpop.xlane.xlu0 %527
    %529 = vadd.xlane.f32.xlu0 %v526
    %v530 = vpop.xlane.xlu0 %529
    %v531 = vmul.f32 %v528, 0.17677669
    %v532 = vmul.f32 %v530, 0.17677669
    %v533 = vmax.f32 %v412, %v531
    %v534 = vmax.f32 %v413, %v532
    %v535 = vsub.f32 %v412, %v533
    %v536 = vsub.f32 %v413, %v534
    %v537 = vmul.f32 %v535, 1.442695
    %v538 = vpow.pop %v537
    %v539 = vmul.f32 %v536, 1.442695
    %v540 = vpow.pop %v539
    %v541 = vsub.f32 %v531, %v533
    %v542 = vsub.f32 %v532, %v534
    %v543 = vmul.f32 %v541, 1.442695
    %v544 = vpow.pop %v543
    %v545 = vmul.f32 %v542, 1.442695
    %v546 = vpow.pop %v545
    %v547 = vmul.f32 %v538, %v428
    %v548 = vmul.f32 %v540, %v429
    %v549 = vadd.f32 %v547, %v544
    %v550 = vadd.f32 %v548, %v546
    %v551 = vmul.f32 %v538, %v432
    %v552 = vmul.f32 %v540, %v433
    %v553 = vmul.f32 %v544, %v519
    %v554 = vmul.f32 %v546, %v522
    %v555 = vadd.f32 %v551, %v553
    %v556 = vadd.f32 %v552, %v554
    %s557 = scalar_lea.vmem [#allocation2], 16
    %v558 = vld [vmem:[%s557] sm:$0xf]
    %v559 = vld [vmem:[%s557 + $0x4] sm:$0xf]
    %v562 = vunpack.c.l.b16 %v558
    %v563 = vunpack.c.l.b16 %v559
    %v564 = vpack.c.b16 %v563, %v562
    %566 = vmatprep.subr.bf16.mxu0 0
    %567 = vmatpush1.bf16.msra.mxu0 %v260
    %568 = vmatprep.subr.bf16.mxu0 0
    %569 = vmatpush1.bf16.msra.mxu0 %v261
    %570 = vmatprep.subr.bf16.mxu0 0
    %571 = vmatpush1.bf16.msra.mxu0 %v262
    %572 = vmatprep.subr.bf16.mxu0 0
    %573 = vmatpush1.bf16.msra.mxu0 %v263
    %574 = vmatprep.subr.bf16.mxu0 0
    %575 = vmatpush1.bf16.msra.mxu0 %v264
    %576 = vmatprep.subr.bf16.mxu0 0
    %577 = vmatpush1.bf16.msra.mxu0 %v265
    %578 = vmatprep.subr.bf16.mxu0 0
    %579 = vmatpush1.bf16.msra.mxu0 %v266
    %580 = vmatprep.subr.bf16.mxu0 0
    %581 = vmatpush1.bf16.msra.mxu0 %v267
    %582 = vmatprep.subr.bf16.mxu0 0
    %583 = vmatpush1.bf16.msra.mxu0 0
    %584 = vmatprep.subr.bf16.mxu0 0
    %585 = vmatpush1.bf16.msra.mxu0 0
    %586 = vmatprep.subr.bf16.mxu0 0
    %587 = vmatpush1.bf16.msra.mxu0 0
    %588 = vmatprep.subr.bf16.mxu0 0
    %589 = vmatpush1.bf16.msra.mxu0 0
    %590 = vmatprep.subr.bf16.mxu0 0
    %591 = vmatpush1.bf16.msra.mxu0 0
    %592 = vmatprep.subr.bf16.mxu0 0
    %593 = vmatpush1.bf16.msra.mxu0 0
    %594 = vmatprep.subr.bf16.mxu0 0
    %595 = vmatpush1.bf16.msra.mxu0 0
    %596 = vmatprep.subr.bf16.mxu0 0
    %597 = vmatpush1.bf16.msra.mxu0 0
    %598 = vmatprep.mubr.bf16.mxu0 0
    %599 = vmatmul.mubr.bf16.gmra.mrb[0].mxu0 %v564
    %v600 = vpop.f32.mrb[0].mxu0
    %v601 = vadd.f32 0.0, %v600
    %v602 = vpop.f32.mrb[0].mxu0
    %v603 = vpop.f32.mrb[0].mxu0
    %v604 = vadd.f32 0.0, %v603
    %v605 = vpop.f32.mrb[0].mxu0
    %606 = vdwg.mxu0
    %607 = vmatprep.subr.bf16.mxu0 0
    %608 = vmatpush1.bf16.msra.mxu0 %v349
    %609 = vmatprep.subr.bf16.mxu0 0
    %610 = vmatpush1.bf16.msra.mxu0 %v350
    %611 = vmatprep.subr.bf16.mxu0 0
    %612 = vmatpush1.bf16.msra.mxu0 %v351
    %613 = vmatprep.subr.bf16.mxu0 0
    %614 = vmatpush1.bf16.msra.mxu0 %v352
    %615 = vmatprep.subr.bf16.mxu0 0
    %616 = vmatpush1.bf16.msra.mxu0 %v353
    %617 = vmatprep.subr.bf16.mxu0 0
    %618 = vmatpush1.bf16.msra.mxu0 %v354
    %619 = vmatprep.subr.bf16.mxu0 0
    %620 = vmatpush1.bf16.msra.mxu0 %v355
    %621 = vmatprep.subr.bf16.mxu0 0
    %622 = vmatpush1.bf16.msra.mxu0 %v356
    %623 = vmatprep.subr.bf16.mxu0 0
    %624 = vmatpush1.bf16.msra.mxu0 0
    %625 = vmatprep.subr.bf16.mxu0 0
    %626 = vmatpush1.bf16.msra.mxu0 0
    %627 = vmatprep.subr.bf16.mxu0 0
    %628 = vmatpush1.bf16.msra.mxu0 0
    %629 = vmatprep.subr.bf16.mxu0 0
    %630 = vmatpush1.bf16.msra.mxu0 0
    %631 = vmatprep.subr.bf16.mxu0 0
    %632 = vmatpush1.bf16.msra.mxu0 0
    %633 = vmatprep.subr.bf16.mxu0 0
    %634 = vmatpush1.bf16.msra.mxu0 0
    %635 = vmatprep.subr.bf16.mxu0 0
    %636 = vmatpush1.bf16.msra.mxu0 0
    %637 = vmatprep.subr.bf16.mxu0 0
    %638 = vmatpush1.bf16.msra.mxu0 0
    %639 = vmatprep.mubr.bf16.mxu0 0
    %640 = vmatmul.mubr.bf16.gmra.mrb[0].mxu0 %v564
    %v641 = vpop.f32.mrb[0].mxu0
    %v642 = vadd.f32 0.0, %v641
    %v643 = vpop.f32.mrb[0].mxu0
    %v644 = vpop.f32.mrb[0].mxu0
    %v645 = vadd.f32 0.0, %v644
    %v646 = vpop.f32.mrb[0].mxu0
    %647 = vdwg.mxu0
    %v648 = vmul.f32 %v601, %v214
    %v649 = vmul.f32 %v604, %v217
    %650 = vadd.xlane.f32.xlu0 %v648
    %v651 = vpop.xlane.xlu0 %650
    %652 = vadd.xlane.f32.xlu0 %v649
    %v653 = vpop.xlane.xlu0 %652
    %v654 = vmul.f32 %v651, 0.17677669
    %v655 = vmul.f32 %v653, 0.17677669
    %v656 = vmax.f32 %v533, %v654
    %v657 = vmax.f32 %v534, %v655
    %v658 = vsub.f32 %v533, %v656
    %v659 = vsub.f32 %v534, %v657
    %v660 = vmul.f32 %v658, 1.442695
    %v661 = vpow.pop %v660
    %v662 = vmul.f32 %v659, 1.442695
    %v663 = vpow.pop %v662
    %v664 = vsub.f32 %v654, %v656
    %v665 = vsub.f32 %v655, %v657
    %v666 = vmul.f32 %v664, 1.442695
    %v667 = vpow.pop %v666
    %v668 = vmul.f32 %v665, 1.442695
    %v669 = vpow.pop %v668
    %v670 = vmul.f32 %v661, %v549
    %v671 = vmul.f32 %v663, %v550
    %v672 = vadd.f32 %v670, %v667
    %v673 = vadd.f32 %v671, %v669
    %v674 = vmul.f32 %v661, %v555
    %v675 = vmul.f32 %v663, %v556
    %v676 = vmul.f32 %v667, %v642
    %v677 = vmul.f32 %v669, %v645
    %v678 = vadd.f32 %v674, %v676
    %v679 = vadd.f32 %v675, %v677
    %680 = vmatprep.subr.bf16.mxu0 0
    %681 = vmatpush1.bf16.msra.mxu0 %v260
    %682 = vmatprep.subr.bf16.mxu0 0
    %683 = vmatpush1.bf16.msra.mxu0 %v261
    %684 = vmatprep.subr.bf16.mxu0 0
    %685 = vmatpush1.bf16.msra.mxu0 %v262
    %686 = vmatprep.subr.bf16.mxu0 0
    %687 = vmatpush1.bf16.msra.mxu0 %v263
    %688 = vmatprep.subr.bf16.mxu0 0
    %689 = vmatpush1.bf16.msra.mxu0 %v264
    %690 = vmatprep.subr.bf16.mxu0 0
    %691 = vmatpush1.bf16.msra.mxu0 %v265
    %692 = vmatprep.subr.bf16.mxu0 0
    %693 = vmatpush1.bf16.msra.mxu0 %v266
    %694 = vmatprep.subr.bf16.mxu0 0
    %695 = vmatpush1.bf16.msra.mxu0 %v267
    %696 = vmatprep.subr.bf16.mxu0 0
    %697 = vmatpush1.bf16.msra.mxu0 0
    %698 = vmatprep.subr.bf16.mxu0 0
    %699 = vmatpush1.bf16.msra.mxu0 0
    %700 = vmatprep.subr.bf16.mxu0 0
    %701 = vmatpush1.bf16.msra.mxu0 0
    %702 = vmatprep.subr.bf16.mxu0 0
    %703 = vmatpush1.bf16.msra.mxu0 0
    %704 = vmatprep.subr.bf16.mxu0 0
    %705 = vmatpush1.bf16.msra.mxu0 0
    %706 = vmatprep.subr.bf16.mxu0 0
    %707 = vmatpush1.bf16.msra.mxu0 0
    %708 = vmatprep.subr.bf16.mxu0 0
    %709 = vmatpush1.bf16.msra.mxu0 0
    %710 = vmatprep.subr.bf16.mxu0 0
    %711 = vmatpush1.bf16.msra.mxu0 0
    %712 = vmatprep.mubr.bf16.mxu0 0
    %713 = vmatmul.mubr.bf16.gmra.mrb[0].mxu0 %v129
    %v714 = vpop.f32.mrb[0].mxu0
    %v715 = vadd.f32 0.0, %v714
    %v716 = vpop.f32.mrb[0].mxu0
    %v717 = vpop.f32.mrb[0].mxu0
    %v718 = vadd.f32 0.0, %v717
    %v719 = vpop.f32.mrb[0].mxu0
    %720 = vdwg.mxu0
    %721 = vmatprep.subr.bf16.mxu0 0
    %722 = vmatpush1.bf16.msra.mxu0 %v349
    %723 = vmatprep.subr.bf16.mxu0 0
    %724 = vmatpush1.bf16.msra.mxu0 %v350
    %725 = vmatprep.subr.bf16.mxu0 0
    %726 = vmatpush1.bf16.msra.mxu0 %v351
    %727 = vmatprep.subr.bf16.mxu0 0
    %728 = vmatpush1.bf16.msra.mxu0 %v352
    %729 = vmatprep.subr.bf16.mxu0 0
    %730 = vmatpush1.bf16.msra.mxu0 %v353
    %731 = vmatprep.subr.bf16.mxu0 0
    %732 = vmatpush1.bf16.msra.mxu0 %v354
    %733 = vmatprep.subr.bf16.mxu0 0
    %734 = vmatpush1.bf16.msra.mxu0 %v355
    %735 = vmatprep.subr.bf16.mxu0 0
    %736 = vmatpush1.bf16.msra.mxu0 %v356
    %737 = vmatprep.subr.bf16.mxu0 0
    %738 = vmatpush1.bf16.msra.mxu0 0
    %739 = vmatprep.subr.bf16.mxu0 0
    %740 = vmatpush1.bf16.msra.mxu0 0
    %741 = vmatprep.subr.bf16.mxu0 0
    %742 = vmatpush1.bf16.msra.mxu0 0
    %743 = vmatprep.subr.bf16.mxu0 0
    %744 = vmatpush1.bf16.msra.mxu0 0
    %745 = vmatprep.subr.bf16.mxu0 0
    %746 = vmatpush1.bf16.msra.mxu0 0
    %747 = vmatprep.subr.bf16.mxu0 0
    %748 = vmatpush1.bf16.msra.mxu0 0
    %749 = vmatprep.subr.bf16.mxu0 0
    %750 = vmatpush1.bf16.msra.mxu0 0
    %751 = vmatprep.subr.bf16.mxu0 0
    %752 = vmatpush1.bf16.msra.mxu0 0
    %753 = vmatprep.mubr.bf16.mxu0 0
    %754 = vmatmul.mubr.bf16.gmra.mrb[0].mxu0 %v129
    %v755 = vpop.f32.mrb[0].mxu0
    %v756 = vadd.f32 0.0, %v755
    %v757 = vpop.f32.mrb[0].mxu0
    %v758 = vpop.f32.mrb[0].mxu0
    %v759 = vadd.f32 0.0, %v758
    %v760 = vpop.f32.mrb[0].mxu0
    %761 = vdwg.mxu0
    %v762 = vmul.f32 %v715, %v214
    %v763 = vmul.f32 %v718, %v217
    %764 = vadd.xlane.f32.xlu0 %v762
    %v765 = vpop.xlane.xlu0 %764
    %766 = vadd.xlane.f32.xlu0 %v763
    %v767 = vpop.xlane.xlu0 %766
    %v768 = vmul.f32 %v765, 0.17677669
    %v769 = vmul.f32 %v767, 0.17677669
    %v770 = vmax.f32 %v656, %v768
    %v771 = vmax.f32 %v657, %v769
    %v772 = vsub.f32 %v656, %v770
    %v773 = vsub.f32 %v657, %v771
    %v774 = vmul.f32 %v772, 1.442695
    %v775 = vpow.pop %v774
    %v776 = vmul.f32 %v773, 1.442695
    %v777 = vpow.pop %v776
    %v778 = vsub.f32 %v768, %v770
    %v779 = vsub.f32 %v769, %v771
    %v780 = vmul.f32 %v778, 1.442695
    %v781 = vpow.pop %v780
    %v782 = vmul.f32 %v779, 1.442695
    %v783 = vpow.pop %v782
    %v784 = vmul.f32 %v775, %v672
    %v785 = vmul.f32 %v777, %v673
    %v786 = vadd.f32 %v784, %v781
    %v787 = vadd.f32 %v785, %v783
    %v788 = vmul.f32 %v775, %v678
    %v789 = vmul.f32 %v777, %v679
    %v790 = vmul.f32 %v781, %v756
    %v791 = vmul.f32 %v783, %v759
    %v792 = vadd.f32 %v788, %v790
    %v793 = vadd.f32 %v789, %v791
    %v794 = vrcp.pop %v786
    %v795 = vrcp.pop %v787
    %v796 = vmul.f32 %v792, %v794
    %v797 = vmul.f32 %v793, %v795
    %798 = vst [vmem:[#allocation10] sm:$0xff] %v796
    %799 = vst [vmem:[#allocation10 + $0x8] sm:$0xff] %v797
    // Predicated region
    $region34: #{my_dgnn_forward.6} parent=1 // pred_check
      _
    $region35: #{my_dgnn_forward.6} parent=1 // pred_check_branch
      %801 = sbr.rel (0) target = $region37
    $region36: #{my_dgnn_forward.6} parent=1 // pred_region
      %s803 = ssub.s32 256, 256
      %804 = vsyncadd [#allocation4], %s803
      %s805 = sshll.u32 [#allocation10], 4
      %s806 = int_to_ptr.vmem [resolvable:$true] %s805
      %811 = dma.vmem_to_hbm [thread:$0]  %s806, 256, %s4, [#allocation4], 128, 128, 8
    $region37: #{my_dgnn_forward.6} parent=1 // pred_fallthru
      _
    // Predicated region
    $region38: #{my_dgnn_forward.6} parent=1 // pred_check
      _
    $region39: #{my_dgnn_forward.6} parent=1 // pred_check_branch
      %813 = sbr.rel (0) target = $region41
    $region40: #{my_dgnn_forward.6} parent=1 // pred_region
      %814 = dma.done [#allocation4], 256
    $region41: #{my_dgnn_forward.6} parent=1 // pred_fallthru
      _
    %815 = vsyncpa [#allocation3], 1
    %816 = vsyncpa [#allocation6], 1
    %817 = vsyncpa [#allocation9], 1
    %818 = vsyncpa [#allocation4], 1

// kernel: my_dgnn_forward.7
$region0: #{my_dgnn_forward.7}
  #allocation0 [shape = 'u32[]', space=smem, size = 0x4, offset = 0x4, fixed_abs, tag = 'smem constant byte address 0x4 - core index']
  #allocation1 [shape = 'u32[144,128]{1,0:T(1,128)}', space=vmem, size = 0x12000, scoped, tag = 'internal scratch']
  %s0 = inlined_call_operand.hbm [shape: bf16[8,128], index: 0, kind: input, shape index: {}]
  %s1 = inlined_call_operand.hbm [shape: bf16[128,128], index: 1, kind: input, shape index: {}]
  %s2 = inlined_call_operand.hbm [shape: f32[1,128], index: 2, kind: input, shape index: {}]
  %s3 = inlined_call_operand.hbm [shape: bf16[128,128], index: 3, kind: input, shape index: {}]
  %s4 = inlined_call_operand.hbm [shape: f32[1,128], index: 4, kind: input, shape index: {}]
  %s5 = inlined_call_operand.hbm [shape: f32[8,128], index: 5, kind: output, shape index: {}]
  %s6 = sld [smem:[#allocation0]]
  $region50: #{my_dgnn_forward.7} parent=0
    _
  %s8 = ssub.s32 1, %s6
  %s9 = scalar_select 0, %s8, %s6
  $region1: #{my_dgnn_forward.7} parent=0
    #allocation2 [shape = 'u8[2048]{0}', space=vmem, size = 0x800, scoped, tag = 'input window, operand 0, single buffered']
    #allocation3 [shape = 's32[1]{0}', space=sflag, size = 0x4, scoped, tag = 'scoped memory for my_dgnn_forward.7']
    #allocation4 [shape = 's32[1]{0}', space=sflag, size = 0x4, scoped, tag = 'scoped memory for my_dgnn_forward.7']
    #allocation5 [shape = 'u8[32768]{0}', space=vmem, size = 0x8000, scoped, tag = 'input window, operand 1, single buffered']
    #allocation6 [shape = 's32[1]{0}', space=sflag, size = 0x4, scoped, tag = 'scoped memory for my_dgnn_forward.7']
    #allocation7 [shape = 'u8[512]{0}', space=vmem, size = 0x400, scoped, tag = 'input window, operand 2, single buffered']
    #allocation8 [shape = 'u8[32768]{0}', space=vmem, size = 0x8000, scoped, tag = 'input window, operand 3, single buffered']
    #allocation9 [shape = 's32[1]{0}', space=sflag, size = 0x4, scoped, tag = 'scoped memory for my_dgnn_forward.7']
    #allocation10 [shape = 'u8[512]{0}', space=vmem, size = 0x400, scoped, tag = 'input window, operand 4, single buffered']
    #allocation11 [shape = 'u8[4096]{0}', space=vmem, size = 0x1000, scoped, tag = 'output window, operand 0, single buffered']
    %10 = vsyncpa [#allocation3], 0
    %11 = vsyncpa [#allocation6], 0
    %12 = vsyncpa [#allocation9], 0
    %13 = vsyncpa [#allocation4], 0
    // Predicated region
    $region2: #{my_dgnn_forward.7} parent=1 // pred_check
      _
    $region3: #{my_dgnn_forward.7} parent=1 // pred_check_branch
      %15 = sbr.rel (0) target = $region5
    $region4: #{my_dgnn_forward.7} parent=1 // pred_region
      %s17 = ssub.s32 64, 64
      %18 = vsyncadd [#allocation3], %s17
      %s20 = sshll.u32 [#allocation2], 4
      %s21 = int_to_ptr.vmem [resolvable:$true] %s20
      %23 = dma.hbm_to_vmem [thread:$0]  %s0, 64, %s21, [#allocation3]
    $region5: #{my_dgnn_forward.7} parent=1 // pred_fallthru
      _
    // Predicated region
    $region6: #{my_dgnn_forward.7} parent=1 // pred_check
      _
    $region7: #{my_dgnn_forward.7} parent=1 // pred_check_branch
      %25 = sbr.rel (0) target = $region9
    $region8: #{my_dgnn_forward.7} parent=1 // pred_region
      %s27 = ssub.s32 1024, 1024
      %28 = vsyncadd [#allocation6], %s27
      %s29 = sshll.u32 [#allocation5], 4
      %s30 = int_to_ptr.vmem [resolvable:$true] %s29
      %35 = dma.hbm_to_vmem [thread:$0]  %s1, 1024, %s30, [#allocation6], 64, 64, 4
    $region9: #{my_dgnn_forward.7} parent=1 // pred_fallthru
      _
    // Predicated region
    $region10: #{my_dgnn_forward.7} parent=1 // pred_check
      _
    $region11: #{my_dgnn_forward.7} parent=1 // pred_check_branch
      %37 = sbr.rel (0) target = $region13
    $region12: #{my_dgnn_forward.7} parent=1 // pred_region
      %s39 = ssub.s32 16, 16
      %40 = vsyncadd [#allocation6], %s39
      %s42 = sshll.u32 [#allocation7], 4
      %s43 = int_to_ptr.vmem [resolvable:$true] %s42
      %45 = dma.hbm_to_vmem [thread:$0]  %s2, 16, %s43, [#allocation6]
    $region13: #{my_dgnn_forward.7} parent=1 // pred_fallthru
      _
    // Predicated region
    $region14: #{my_dgnn_forward.7} parent=1 // pred_check
      _
    $region15: #{my_dgnn_forward.7} parent=1 // pred_check_branch
      %47 = sbr.rel (0) target = $region17
    $region16: #{my_dgnn_forward.7} parent=1 // pred_region
      %s49 = ssub.s32 1024, 1024
      %50 = vsyncadd [#allocation9], %s49
      %s51 = sshll.u32 [#allocation8], 4
      %s52 = int_to_ptr.vmem [resolvable:$true] %s51
      %57 = dma.hbm_to_vmem [thread:$0]  %s3, 1024, %s52, [#allocation9], 64, 64, 4
    $region17: #{my_dgnn_forward.7} parent=1 // pred_fallthru
      _
    // Predicated region
    $region18: #{my_dgnn_forward.7} parent=1 // pred_check
      _
    $region19: #{my_dgnn_forward.7} parent=1 // pred_check_branch
      %59 = sbr.rel (0) target = $region21
    $region20: #{my_dgnn_forward.7} parent=1 // pred_region
      %s61 = ssub.s32 16, 16
      %62 = vsyncadd [#allocation9], %s61
      %s64 = sshll.u32 [#allocation10], 4
      %s65 = int_to_ptr.vmem [resolvable:$true] %s64
      %67 = dma.hbm_to_vmem [thread:$0]  %s4, 16, %s65, [#allocation9]
    $region21: #{my_dgnn_forward.7} parent=1 // pred_fallthru
      _
    // Predicated region
    $region22: #{my_dgnn_forward.7} parent=1 // pred_check
      _
    $region23: #{my_dgnn_forward.7} parent=1 // pred_check_branch
      %69 = sbr.rel (0) target = $region25
    $region24: #{my_dgnn_forward.7} parent=1 // pred_region
      %70 = dma.done [#allocation3], 64
    $region25: #{my_dgnn_forward.7} parent=1 // pred_fallthru
      _
    // Predicated region
    $region26: #{my_dgnn_forward.7} parent=1 // pred_check
      _
    $region27: #{my_dgnn_forward.7} parent=1 // pred_check_branch
      %72 = sbr.rel (0) target = $region29
    $region28: #{my_dgnn_forward.7} parent=1 // pred_region
      %73 = dma.done [#allocation6], 1024
    $region29: #{my_dgnn_forward.7} parent=1 // pred_fallthru
      _
    // Predicated region
    $region30: #{my_dgnn_forward.7} parent=1 // pred_check
      _
    $region31: #{my_dgnn_forward.7} parent=1 // pred_check_branch
      %75 = sbr.rel (0) target = $region33
    $region32: #{my_dgnn_forward.7} parent=1 // pred_region
      %76 = dma.done [#allocation6], 16
    $region33: #{my_dgnn_forward.7} parent=1 // pred_fallthru
      _
    // Predicated region
    $region34: #{my_dgnn_forward.7} parent=1 // pred_check
      _
    $region35: #{my_dgnn_forward.7} parent=1 // pred_check_branch
      %78 = sbr.rel (0) target = $region37
    $region36: #{my_dgnn_forward.7} parent=1 // pred_region
      %79 = dma.done [#allocation9], 1024
    $region37: #{my_dgnn_forward.7} parent=1 // pred_fallthru
      _
    // Predicated region
    $region38: #{my_dgnn_forward.7} parent=1 // pred_check
      _
    $region39: #{my_dgnn_forward.7} parent=1 // pred_check_branch
      %81 = sbr.rel (0) target = $region41
    $region40: #{my_dgnn_forward.7} parent=1 // pred_region
      %82 = dma.done [#allocation9], 16
    $region41: #{my_dgnn_forward.7} parent=1 // pred_fallthru
      _
    %v84 = vld [vmem:[#allocation2] sm:$0xf]
    %v85 = vld [vmem:[#allocation5] sm:$0xf]
    %v86 = vld [vmem:[#allocation5 + $0x4] sm:$0xf]
    %v87 = vld [vmem:[#allocation5 + $0x8] sm:$0xf]
    %v88 = vld [vmem:[#allocation5 + $0xc] sm:$0xf]
    %v89 = vld [vmem:[#allocation5 + $0x10] sm:$0xf]
    %v90 = vld [vmem:[#allocation5 + $0x14] sm:$0xf]
    %v91 = vld [vmem:[#allocation5 + $0x18] sm:$0xf]
    %v92 = vld [vmem:[#allocation5 + $0x1c] sm:$0xf]
    %v93 = vld [vmem:[#allocation5 + $0x20] sm:$0xf]
    %v94 = vld [vmem:[#allocation5 + $0x24] sm:$0xf]
    %v95 = vld [vmem:[#allocation5 + $0x28] sm:$0xf]
    %v96 = vld [vmem:[#allocation5 + $0x2c] sm:$0xf]
    %v97 = vld [vmem:[#allocation5 + $0x30] sm:$0xf]
    %v98 = vld [vmem:[#allocation5 + $0x34] sm:$0xf]
    %v99 = vld [vmem:[#allocation5 + $0x38] sm:$0xf]
    %v100 = vld [vmem:[#allocation5 + $0x3c] sm:$0xf]
    %v101 = vld [vmem:[#allocation7] sm:$0x1]
    %v103 = vlaneseq
    %v104 = vshrl.u32 %v103, 7
    %v105 = vsub.s32 0, %v104
    %v106 = vrot.slane %v101, %v105
    %v124 = vunpack.c.l.b16 %v85
    %v125 = vunpack.c.l.b16 %v86
    %v126 = vunpack.c.l.b16 %v87
    %v127 = vunpack.c.l.b16 %v88
    %v128 = vunpack.c.l.b16 %v89
    %v129 = vunpack.c.l.b16 %v90
    %v130 = vunpack.c.l.b16 %v91
    %v131 = vunpack.c.l.b16 %v92
    %v132 = vunpack.c.l.b16 %v93
    %v133 = vunpack.c.l.b16 %v94
    %v134 = vunpack.c.l.b16 %v95
    %v135 = vunpack.c.l.b16 %v96
    %v136 = vunpack.c.l.b16 %v97
    %v137 = vunpack.c.l.b16 %v98
    %v138 = vunpack.c.l.b16 %v99
    %v139 = vunpack.c.l.b16 %v100
    %v140 = vpack.c.b16 %v125, %v124
    %v141 = vpack.c.b16 %v127, %v126
    %v142 = vpack.c.b16 %v129, %v128
    %v143 = vpack.c.b16 %v131, %v130
    %v144 = vpack.c.b16 %v133, %v132
    %v145 = vpack.c.b16 %v135, %v134
    %v146 = vpack.c.b16 %v137, %v136
    %v147 = vpack.c.b16 %v139, %v138
    %156 = vmatprep.subr.bf16.mxu0 0
    %157 = vmatpush1.bf16.msra.mxu0 %v140
    %158 = vmatprep.subr.bf16.mxu0 0
    %159 = vmatpush1.bf16.msra.mxu0 %v141
    %160 = vmatprep.subr.bf16.mxu0 0
    %161 = vmatpush1.bf16.msra.mxu0 %v142
    %162 = vmatprep.subr.bf16.mxu0 0
    %163 = vmatpush1.bf16.msra.mxu0 %v143
    %164 = vmatprep.subr.bf16.mxu0 0
    %165 = vmatpush1.bf16.msra.mxu0 %v144
    %166 = vmatprep.subr.bf16.mxu0 0
    %167 = vmatpush1.bf16.msra.mxu0 %v145
    %168 = vmatprep.subr.bf16.mxu0 0
    %169 = vmatpush1.bf16.msra.mxu0 %v146
    %170 = vmatprep.subr.bf16.mxu0 0
    %171 = vmatpush1.bf16.msra.mxu0 %v147
    %172 = vmatprep.subr.bf16.mxu0 0
    %173 = vmatpush1.bf16.msra.mxu0 0
    %174 = vmatprep.subr.bf16.mxu0 0
    %175 = vmatpush1.bf16.msra.mxu0 0
    %176 = vmatprep.subr.bf16.mxu0 0
    %177 = vmatpush1.bf16.msra.mxu0 0
    %178 = vmatprep.subr.bf16.mxu0 0
    %179 = vmatpush1.bf16.msra.mxu0 0
    %180 = vmatprep.subr.bf16.mxu0 0
    %181 = vmatpush1.bf16.msra.mxu0 0
    %182 = vmatprep.subr.bf16.mxu0 0
    %183 = vmatpush1.bf16.msra.mxu0 0
    %184 = vmatprep.subr.bf16.mxu0 0
    %185 = vmatpush1.bf16.msra.mxu0 0
    %186 = vmatprep.subr.bf16.mxu0 0
    %187 = vmatpush1.bf16.msra.mxu0 0
    %188 = vmatprep.mubr.bf16.mxu0 0
    %189 = vmatmul.mubr.bf16.gmra.mrb[0].mxu0 %v84
    %v190 = vpop.f32.mrb[0].mxu0
    %v191 = vadd.f32 %v106, %v190
    %v192 = vpop.f32.mrb[0].mxu0
    %v193 = vpop.f32.mrb[0].mxu0
    %v194 = vpop.f32.mrb[0].mxu0
    %195 = vdwg.mxu0
    %v196 = vmax.f32 %v191, 0.0
    %v197 = vpack.c.bf16 %v196, %v196
    %v198 = vld [vmem:[#allocation8] sm:$0xf]
    %v199 = vld [vmem:[#allocation8 + $0x4] sm:$0xf]
    %v200 = vld [vmem:[#allocation8 + $0x8] sm:$0xf]
    %v201 = vld [vmem:[#allocation8 + $0xc] sm:$0xf]
    %v202 = vld [vmem:[#allocation8 + $0x10] sm:$0xf]
    %v203 = vld [vmem:[#allocation8 + $0x14] sm:$0xf]
    %v204 = vld [vmem:[#allocation8 + $0x18] sm:$0xf]
    %v205 = vld [vmem:[#allocation8 + $0x1c] sm:$0xf]
    %v206 = vld [vmem:[#allocation8 + $0x20] sm:$0xf]
    %v207 = vld [vmem:[#allocation8 + $0x24] sm:$0xf]
    %v208 = vld [vmem:[#allocation8 + $0x28] sm:$0xf]
    %v209 = vld [vmem:[#allocation8 + $0x2c] sm:$0xf]
    %v210 = vld [vmem:[#allocation8 + $0x30] sm:$0xf]
    %v211 = vld [vmem:[#allocation8 + $0x34] sm:$0xf]
    %v212 = vld [vmem:[#allocation8 + $0x38] sm:$0xf]
    %v213 = vld [vmem:[#allocation8 + $0x3c] sm:$0xf]
    %v214 = vld [vmem:[#allocation10] sm:$0x1]
    %v216 = vlaneseq
    %v217 = vshrl.u32 %v216, 7
    %v218 = vsub.s32 0, %v217
    %v219 = vrot.slane %v214, %v218
    %v237 = vunpack.c.l.b16 %v198
    %v238 = vunpack.c.l.b16 %v199
    %v239 = vunpack.c.l.b16 %v200
    %v240 = vunpack.c.l.b16 %v201
    %v241 = vunpack.c.l.b16 %v202
    %v242 = vunpack.c.l.b16 %v203
    %v243 = vunpack.c.l.b16 %v204
    %v244 = vunpack.c.l.b16 %v205
    %v245 = vunpack.c.l.b16 %v206
    %v246 = vunpack.c.l.b16 %v207
    %v247 = vunpack.c.l.b16 %v208
    %v248 = vunpack.c.l.b16 %v209
    %v249 = vunpack.c.l.b16 %v210
    %v250 = vunpack.c.l.b16 %v211
    %v251 = vunpack.c.l.b16 %v212
    %v252 = vunpack.c.l.b16 %v213
    %v253 = vpack.c.b16 %v238, %v237
    %v254 = vpack.c.b16 %v240, %v239
    %v255 = vpack.c.b16 %v242, %v241
    %v256 = vpack.c.b16 %v244, %v243
    %v257 = vpack.c.b16 %v246, %v245
    %v258 = vpack.c.b16 %v248, %v247
    %v259 = vpack.c.b16 %v250, %v249
    %v260 = vpack.c.b16 %v252, %v251
    %269 = vmatprep.subr.bf16.mxu0 0
    %270 = vmatpush1.bf16.msra.mxu0 %v253
    %271 = vmatprep.subr.bf16.mxu0 0
    %272 = vmatpush1.bf16.msra.mxu0 %v254
    %273 = vmatprep.subr.bf16.mxu0 0
    %274 = vmatpush1.bf16.msra.mxu0 %v255
    %275 = vmatprep.subr.bf16.mxu0 0
    %276 = vmatpush1.bf16.msra.mxu0 %v256
    %277 = vmatprep.subr.bf16.mxu0 0
    %278 = vmatpush1.bf16.msra.mxu0 %v257
    %279 = vmatprep.subr.bf16.mxu0 0
    %280 = vmatpush1.bf16.msra.mxu0 %v258
    %281 = vmatprep.subr.bf16.mxu0 0
    %282 = vmatpush1.bf16.msra.mxu0 %v259
    %283 = vmatprep.subr.bf16.mxu0 0
    %284 = vmatpush1.bf16.msra.mxu0 %v260
    %285 = vmatprep.subr.bf16.mxu0 0
    %286 = vmatpush1.bf16.msra.mxu0 0
    %287 = vmatprep.subr.bf16.mxu0 0
    %288 = vmatpush1.bf16.msra.mxu0 0
    %289 = vmatprep.subr.bf16.mxu0 0
    %290 = vmatpush1.bf16.msra.mxu0 0
    %291 = vmatprep.subr.bf16.mxu0 0
    %292 = vmatpush1.bf16.msra.mxu0 0
    %293 = vmatprep.subr.bf16.mxu0 0
    %294 = vmatpush1.bf16.msra.mxu0 0
    %295 = vmatprep.subr.bf16.mxu0 0
    %296 = vmatpush1.bf16.msra.mxu0 0
    %297 = vmatprep.subr.bf16.mxu0 0
    %298 = vmatpush1.bf16.msra.mxu0 0
    %299 = vmatprep.subr.bf16.mxu0 0
    %300 = vmatpush1.bf16.msra.mxu0 0
    %301 = vmatprep.mubr.bf16.mxu0 0
    %302 = vmatmul.mubr.bf16.gmra.mrb[0].mxu0 %v197
    %v303 = vpop.f32.mrb[0].mxu0
    %v304 = vadd.f32 %v219, %v303
    %v305 = vpop.f32.mrb[0].mxu0
    %v306 = vpop.f32.mrb[0].mxu0
    %v307 = vpop.f32.mrb[0].mxu0
    %308 = vdwg.mxu0
    %309 = vst [vmem:[#allocation11] sm:$0xff] %v304
    // Predicated region
    $region42: #{my_dgnn_forward.7} parent=1 // pred_check
      _
    $region43: #{my_dgnn_forward.7} parent=1 // pred_check_branch
      %311 = sbr.rel (0) target = $region45
    $region44: #{my_dgnn_forward.7} parent=1 // pred_region
      %s313 = ssub.s32 128, 128
      %314 = vsyncadd [#allocation4], %s313
      %s316 = sshll.u32 [#allocation11], 4
      %s317 = int_to_ptr.vmem [resolvable:$true] %s316
      %319 = dma.vmem_to_hbm [thread:$0]  %s317, 128, %s5, [#allocation4]
    $region45: #{my_dgnn_forward.7} parent=1 // pred_fallthru
      _
    // Predicated region
    $region46: #{my_dgnn_forward.7} parent=1 // pred_check
      _
    $region47: #{my_dgnn_forward.7} parent=1 // pred_check_branch
      %321 = sbr.rel (0) target = $region49
    $region48: #{my_dgnn_forward.7} parent=1 // pred_region
      %322 = dma.done [#allocation4], 128
    $region49: #{my_dgnn_forward.7} parent=1 // pred_fallthru
      _
    %323 = vsyncpa [#allocation3], 1
    %324 = vsyncpa [#allocation6], 1
    %325 = vsyncpa [#allocation9], 1
    %326 = vsyncpa [#allocation4], 1

</llo_original>
